<compile_context>
chip_gen: v7x
topology: tpu7x:2x2x1
jax: 0.10.0
libtpu: 0.0.40
codegen_flags: <defaults>
</compile_context>

<pallas_src>
import functools

import jax
import jax.numpy as jnp
from jax.experimental import pallas as pl
from jax.experimental.pallas import tpu as pltpu


# -----------------------------------------------------------------------------
# Kernel
# -----------------------------------------------------------------------------
def station_traffic_kernel(x_ref,
                           enc_wi_ref, enc_wh_ref, enc_bi_ref, enc_bh_ref,
                           dec_comb_ref, dec_bi_ref, dec_bcomp_ref, dec_bh_ref,
                           head_w_ref, head_b_ref,
                           out_ref,
                           *, batch, seq_len, out_seq_len):
    B = batch
    T = seq_len
    S = out_seq_len
    H = enc_wh_ref.shape[0]
    H3 = 3 * H

    def gru_update(gi, gh, h):
        # gi/gh: (B, 3H) with gates concatenated [r | z | n] on the lane axis.
        r = jax.nn.sigmoid(gi[:, :H] + gh[:, :H])
        z = jax.nn.sigmoid(gi[:, H:2 * H] + gh[:, H:2 * H])
        n = jnp.tanh(gi[:, 2 * H:] + r * gh[:, 2 * H:])
        return (1.0 - z) * n + z * h

    # ---- Encoder: hoisted input projection (one matmul for all T timesteps).
    x_flat = x_ref[...]                                   # (T*B, I), rows are t*B + b
    gi_all = (jnp.dot(x_flat, enc_wi_ref[...], preferred_element_type=jnp.float32)
              + enc_bi_ref[...])                          # (T*B, 3H)

    enc_wh = enc_wh_ref[...]                              # (H, 3H)
    enc_bh = jnp.broadcast_to(enc_bh_ref[...], (B, H3))   # hoisted bias broadcast

    h = jnp.zeros((B, H), jnp.float32)
    for t in range(T):  # static unroll: EUP/VPU of step t overlaps the MXU push of step t+1
        gi = gi_all[t * B:(t + 1) * B, :]                 # static sublane slice
        if t == 0:
            gh = enc_bh                                   # h0 == 0 -> skip the matmul
        else:
            gh = jnp.dot(h, enc_wh, preferred_element_type=jnp.float32) + enc_bh
        h = gru_update(gi, gh, h)

    # ---- Decoder: linear head folded into the recurrence -> one (B,H)x(H,6H) dot per step.
    #      dec_comb = [ out_w @ dec_wi | dec_wh ]  (H, 6H)
    #      (On v5e's 128-wide MXU the 192-wide N splits into 2 passes; on v6e/v7x it is one pass.)
    dec_comb = dec_comb_ref[...]
    dec_bi = jnp.broadcast_to(dec_bi_ref[...], (B, H3))       # gi for step 0 (input is zeros)
    dec_bcomp = jnp.broadcast_to(dec_bcomp_ref[...], (B, H3))  # out_b @ dec_wi + dec_bi
    dec_bh = jnp.broadcast_to(dec_bh_ref[...], (B, H3))

    hs = []
    for s in range(S):  # static unroll (out_seq_len is compile-time)
        comb = jnp.dot(h, dec_comb, preferred_element_type=jnp.float32)  # (B, 6H)
        gi = dec_bi if s == 0 else comb[:, :H3] + dec_bcomp
        gh = comb[:, H3:] + dec_bh
        h = gru_update(gi, gh, h)
        hs.append(h)

    # ---- Output head: one block-diagonal matmul + a single lane-dense store after the loop.
    h_cat = jnp.concatenate(hs, axis=1)                   # (B, S*H)
    preds = (jnp.dot(h_cat, head_w_ref[...], preferred_element_type=jnp.float32)
             + head_b_ref[...])                           # (B, S*O)
    out_ref[...] = preds


# -----------------------------------------------------------------------------
# Wrapper
# -----------------------------------------------------------------------------
def station_traffic_forward(x, kp, out_seq_len):
    """x: (batch, seq_len, input_size) f32 -> (batch, out_seq_len, output_size) f32."""
    B, T, I = x.shape
    S = out_seq_len
    O = kp["head_w"].shape[1] // S

    # Time-major flattened input: row t*B + b == x[b, t, :].
    x_flat = jnp.transpose(x, (1, 0, 2)).reshape(T * B, I)

    kernel = functools.partial(station_traffic_kernel,
                               batch=B, seq_len=T, out_seq_len=S)
    vmem = pl.BlockSpec(memory_space=pltpu.MemorySpace.VMEM)
    args = (x_flat,
            kp["enc_wi"], kp["enc_wh"], kp["enc_bi"], kp["enc_bh"],
            kp["dec_comb"], kp["dec_bi"], kp["dec_bcomp"], kp["dec_bh"],
            kp["head_w"], kp["head_b"])

    out_flat = pl.pallas_call(
        kernel,
        out_shape=jax.ShapeDtypeStruct((B, S * O), jnp.float32),
        in_specs=[vmem] * len(args),
        out_specs=vmem,
    )(*args)
    return out_flat.reshape(B, S, O)


# -----------------------------------------------------------------------------
# Parameters
# -----------------------------------------------------------------------------
def init_raw_params(key, input_size, hidden_size, output_size):
    """PyTorch-layout params: weight_ih (3H, in), weight_hh (3H, H), biases (3H,), gate order [r|z|n]."""
    H = hidden_size
    bound = 1.0 / (H ** 0.5)
    keys = jax.random.split(key, 10)

    def u(k_, shape):
        return jax.random.uniform(k_, shape, jnp.float32, -bound, bound)

    return {
        "enc_w_ih": u(keys[0], (3 * H, input_size)),
        "enc_w_hh": u(keys[1], (3 * H, H)),
        "enc_b_ih": u(keys[2], (3 * H,)),
        "enc_b_hh": u(keys[3], (3 * H,)),
        "dec_w_ih": u(keys[4], (3 * H, output_size)),
        "dec_w_hh": u(keys[5], (3 * H, H)),
        "dec_b_ih": u(keys[6], (3 * H,)),
        "dec_b_hh": u(keys[7], (3 * H,)),
        "out_w":    u(keys[8], (output_size, H)),
        "out_b":    u(keys[9], (output_size,)),
    }


def prepare_kernel_params(raw, out_seq_len):
    """One-time host-side recomposition of the PyTorch params into kernel-friendly layouts."""
    H = raw["enc_w_hh"].shape[1]
    O = raw["out_w"].shape[0]
    S = out_seq_len

    enc_wi = raw["enc_w_ih"].T                       # (I, 3H), gates on lane axis
    enc_wh = raw["enc_w_hh"].T                       # (H, 3H)
    enc_bi = raw["enc_b_ih"].reshape(1, 3 * H)
    enc_bh = raw["enc_b_hh"].reshape(1, 3 * H)

    dec_wi = raw["dec_w_ih"].T                       # (O, 3H)
    dec_wh = raw["dec_w_hh"].T                       # (H, 3H)
    dec_bi = raw["dec_b_ih"].reshape(1, 3 * H)
    dec_bh = raw["dec_b_hh"].reshape(1, 3 * H)

    out_w = raw["out_w"].T                           # (H, O)
    out_b = raw["out_b"].reshape(1, O)

    # Fold the Linear head into the next-step input projection of the decoder.
    w_comp = out_w @ dec_wi                          # (H, 3H)
    b_comp = out_b @ dec_wi + dec_bi                 # (1, 3H)
    dec_comb = jnp.concatenate([w_comp, dec_wh], axis=1)   # (H, 6H)

    # Block-diagonal head: applies out_w to each of the S decoder hidden states in one matmul.
    head_w = jnp.kron(jnp.eye(S, dtype=jnp.float32), out_w)   # (S*H, S*O)
    head_b = jnp.tile(out_b, (1, S))                            # (1, S*O)

    return {
        "enc_wi": enc_wi, "enc_wh": enc_wh, "enc_bi": enc_bi, "enc_bh": enc_bh,
        "dec_comb": dec_comb, "dec_bi": dec_bi, "dec_bcomp": b_comp, "dec_bh": dec_bh,
        "head_w": head_w, "head_b": head_b,
    }


# -----------------------------------------------------------------------------
# Pure-JAX reference mirroring the PyTorch forward exactly (no weight composition).
# -----------------------------------------------------------------------------
def reference_forward(x, raw, out_seq_len):
    B, T, _ = x.shape
    H = raw["enc_w_hh"].shape[1]
    O = raw["out_w"].shape[0]

    def cell(xt, h, w_ih, w_hh, b_ih, b_hh):
        gi = xt @ w_ih.T + b_ih
        gh = h @ w_hh.T + b_hh
        i_r, i_z, i_n = jnp.split(gi, 3, axis=1)
        h_r, h_z, h_n = jnp.split(gh, 3, axis=1)
        r = jax.nn.sigmoid(i_r + h_r)
        z = jax.nn.sigmoid(i_z + h_z)
        n = jnp.tanh(i_n + r * h_n)
        return (1.0 - z) * n + z * h

    h = jnp.zeros((B, H), jnp.float32)
    for t in range(T):
        h = cell(x[:, t, :], h,
                 raw["enc_w_ih"], raw["enc_w_hh"], raw["enc_b_ih"], raw["enc_b_hh"])

    dec_in = jnp.zeros((B, O), jnp.float32)
    outs = []
    for _ in range(out_seq_len):
        h = cell(dec_in, h,
                 raw["dec_w_ih"], raw["dec_w_hh"], raw["dec_b_ih"], raw["dec_b_hh"])
        pred = h @ raw["out_w"].T + raw["out_b"]
        outs.append(pred[:, None, :])
        dec_in = pred
    return jnp.concatenate(outs, axis=1)


if __name__ == "__main__":
    # model_type='gru', input_size=8, hidden_size=32, output_size=8,
    # output_sequence_length=4, num_layers=1, dropout=0.0 (inactive in forward)
    batch, seq_len = 2, 8
    input_size, hidden_size, output_size = 8, 32, 8
    out_seq_len = 4

    key = jax.random.PRNGKey(0)
    k_x, k_p = jax.random.split(key)
    x = jax.random.normal(k_x, (batch, seq_len, input_size), jnp.float32)

    raw = init_raw_params(k_p, input_size, hidden_size, output_size)
    kp = prepare_kernel_params(raw, out_seq_len)

    out = station_traffic_forward(x, kp, out_seq_len)
    out = jax.block_until_ready(out)

    ref = reference_forward(x, raw, out_seq_len)
    assert out.shape == (batch, out_seq_len, output_size)
    # Composed decoder weights reassociate f32 sums -> tiny (~1e-6) deviation vs reference.
    assert jnp.allclose(out, ref, atol=2e-5, rtol=2e-5), "Pallas kernel mismatch vs JAX reference"

    print("KERNEL_OK")
</pallas_src>

<mosaic_0001>
module attributes {stable_mosaic.version = 11 : i64} {
  func.func @station_traffic_kernel(%arg0: memref<16x8xf32, #tpu.memory_space<vmem>>, %arg1: memref<8x96xf32, #tpu.memory_space<vmem>>, %arg2: memref<32x96xf32, #tpu.memory_space<vmem>>, %arg3: memref<1x96xf32, #tpu.memory_space<vmem>>, %arg4: memref<1x96xf32, #tpu.memory_space<vmem>>, %arg5: memref<32x192xf32, #tpu.memory_space<vmem>>, %arg6: memref<1x96xf32, #tpu.memory_space<vmem>>, %arg7: memref<1x96xf32, #tpu.memory_space<vmem>>, %arg8: memref<1x96xf32, #tpu.memory_space<vmem>>, %arg9: memref<128x32xf32, #tpu.memory_space<vmem>>, %arg10: memref<1x32xf32, #tpu.memory_space<vmem>>, %arg11: memref<2x32xf32, #tpu.memory_space<vmem>>) attributes {dimension_semantics = [], scalar_prefetch = 0 : i64, scratch_operands = 0 : i64, tpu.core_type = #tpu.core_type<tc>} {
    %c0 = arith.constant 0 : index
    %c0_0 = arith.constant 0 : index
    %0 = vector.load %arg0[%c0, %c0_0] : memref<16x8xf32, #tpu.memory_space<vmem>>, vector<16x8xf32>
    %c0_1 = arith.constant 0 : index
    %c0_2 = arith.constant 0 : index
    %1 = vector.load %arg1[%c0_1, %c0_2] : memref<8x96xf32, #tpu.memory_space<vmem>>, vector<8x96xf32>
    %cst = arith.constant dense<0.000000e+00> : vector<16x96xf32>
    %2 = tpu.matmul %0, %1, %cst {dimension_numbers = #tpu.dot_dimension_numbers<[1], [0], [0], [1], [0, 0, 1, 1], [], []>} : vector<16x8xf32>, vector<8x96xf32>, vector<16x96xf32> -> vector<16x96xf32>
    %c0_3 = arith.constant 0 : index
    %c0_4 = arith.constant 0 : index
    %3 = vector.load %arg3[%c0_3, %c0_4] : memref<1x96xf32, #tpu.memory_space<vmem>>, vector<1x96xf32>
    %4 = vector.broadcast %3 : vector<1x96xf32> to vector<16x96xf32>
    %5 = arith.addf %2, %4 : vector<16x96xf32>
    %c0_5 = arith.constant 0 : index
    %c0_6 = arith.constant 0 : index
    %6 = vector.load %arg2[%c0_5, %c0_6] : memref<32x96xf32, #tpu.memory_space<vmem>>, vector<32x96xf32>
    %c0_7 = arith.constant 0 : index
    %c0_8 = arith.constant 0 : index
    %7 = vector.load %arg4[%c0_7, %c0_8] : memref<1x96xf32, #tpu.memory_space<vmem>>, vector<1x96xf32>
    %8 = vector.shape_cast %7 : vector<1x96xf32> to vector<1x96xf32>
    %9 = vector.broadcast %8 : vector<1x96xf32> to vector<2x96xf32>
    %cst_9 = arith.constant 0.000000e+00 : f32
    %10 = vector.broadcast %cst_9 : f32 to vector<2x32xf32>
    %11 = vector.extract_strided_slice %5 {offsets = [0, 0], sizes = [2, 96], strides = [1, 1]} : vector<16x96xf32> to vector<2x96xf32>
    %12 = vector.extract_strided_slice %11 {offsets = [0, 0], sizes = [2, 32], strides = [1, 1]} : vector<2x96xf32> to vector<2x32xf32>
    %13 = vector.extract_strided_slice %9 {offsets = [0, 0], sizes = [2, 32], strides = [1, 1]} : vector<2x96xf32> to vector<2x32xf32>
    %14 = arith.addf %12, %13 : vector<2x32xf32>
    %15 = arith.negf %14 : vector<2x32xf32>
    %16 = math.exp %15 : vector<2x32xf32>
    %cst_10 = arith.constant 1.000000e+00 : f32
    %17 = vector.broadcast %cst_10 : f32 to vector<2x32xf32>
    %18 = arith.addf %17, %16 : vector<2x32xf32>
    %19 = arith.divf %17, %18 : vector<2x32xf32>
    %20 = vector.extract_strided_slice %11 {offsets = [0, 32], sizes = [2, 32], strides = [1, 1]} : vector<2x96xf32> to vector<2x32xf32>
    %21 = vector.extract_strided_slice %9 {offsets = [0, 32], sizes = [2, 32], strides = [1, 1]} : vector<2x96xf32> to vector<2x32xf32>
    %22 = arith.addf %20, %21 : vector<2x32xf32>
    %23 = arith.negf %22 : vector<2x32xf32>
    %24 = math.exp %23 : vector<2x32xf32>
    %cst_11 = arith.constant 1.000000e+00 : f32
    %25 = vector.broadcast %cst_11 : f32 to vector<2x32xf32>
    %26 = arith.addf %25, %24 : vector<2x32xf32>
    %27 = arith.divf %25, %26 : vector<2x32xf32>
    %28 = vector.extract_strided_slice %11 {offsets = [0, 64], sizes = [2, 32], strides = [1, 1]} : vector<2x96xf32> to vector<2x32xf32>
    %29 = vector.extract_strided_slice %9 {offsets = [0, 64], sizes = [2, 32], strides = [1, 1]} : vector<2x96xf32> to vector<2x32xf32>
    %30 = arith.mulf %19, %29 : vector<2x32xf32>
    %31 = arith.addf %28, %30 : vector<2x32xf32>
    %32 = math.tanh %31 : vector<2x32xf32>
    %cst_12 = arith.constant 1.000000e+00 : f32
    %33 = vector.broadcast %cst_12 : f32 to vector<2x32xf32>
    %34 = arith.subf %33, %27 : vector<2x32xf32>
    %35 = arith.mulf %34, %32 : vector<2x32xf32>
    %36 = arith.mulf %27, %10 : vector<2x32xf32>
    %37 = arith.addf %35, %36 : vector<2x32xf32>
    %38 = vector.extract_strided_slice %5 {offsets = [2, 0], sizes = [2, 96], strides = [1, 1]} : vector<16x96xf32> to vector<2x96xf32>
    %cst_13 = arith.constant dense<0.000000e+00> : vector<2x96xf32>
    %39 = tpu.matmul %37, %6, %cst_13 {dimension_numbers = #tpu.dot_dimension_numbers<[1], [0], [0], [1], [0, 0, 1, 1], [], []>} : vector<2x32xf32>, vector<32x96xf32>, vector<2x96xf32> -> vector<2x96xf32>
    %40 = arith.addf %39, %9 : vector<2x96xf32>
    %41 = vector.extract_strided_slice %38 {offsets = [0, 0], sizes = [2, 32], strides = [1, 1]} : vector<2x96xf32> to vector<2x32xf32>
    %42 = vector.extract_strided_slice %40 {offsets = [0, 0], sizes = [2, 32], strides = [1, 1]} : vector<2x96xf32> to vector<2x32xf32>
    %43 = arith.addf %41, %42 : vector<2x32xf32>
    %44 = arith.negf %43 : vector<2x32xf32>
    %45 = math.exp %44 : vector<2x32xf32>
    %cst_14 = arith.constant 1.000000e+00 : f32
    %46 = vector.broadcast %cst_14 : f32 to vector<2x32xf32>
    %47 = arith.addf %46, %45 : vector<2x32xf32>
    %48 = arith.divf %46, %47 : vector<2x32xf32>
    %49 = vector.extract_strided_slice %38 {offsets = [0, 32], sizes = [2, 32], strides = [1, 1]} : vector<2x96xf32> to vector<2x32xf32>
    %50 = vector.extract_strided_slice %40 {offsets = [0, 32], sizes = [2, 32], strides = [1, 1]} : vector<2x96xf32> to vector<2x32xf32>
    %51 = arith.addf %49, %50 : vector<2x32xf32>
    %52 = arith.negf %51 : vector<2x32xf32>
    %53 = math.exp %52 : vector<2x32xf32>
    %cst_15 = arith.constant 1.000000e+00 : f32
    %54 = vector.broadcast %cst_15 : f32 to vector<2x32xf32>
    %55 = arith.addf %54, %53 : vector<2x32xf32>
    %56 = arith.divf %54, %55 : vector<2x32xf32>
    %57 = vector.extract_strided_slice %38 {offsets = [0, 64], sizes = [2, 32], strides = [1, 1]} : vector<2x96xf32> to vector<2x32xf32>
    %58 = vector.extract_strided_slice %40 {offsets = [0, 64], sizes = [2, 32], strides = [1, 1]} : vector<2x96xf32> to vector<2x32xf32>
    %59 = arith.mulf %48, %58 : vector<2x32xf32>
    %60 = arith.addf %57, %59 : vector<2x32xf32>
    %61 = math.tanh %60 : vector<2x32xf32>
    %cst_16 = arith.constant 1.000000e+00 : f32
    %62 = vector.broadcast %cst_16 : f32 to vector<2x32xf32>
    %63 = arith.subf %62, %56 : vector<2x32xf32>
    %64 = arith.mulf %63, %61 : vector<2x32xf32>
    %65 = arith.mulf %56, %37 : vector<2x32xf32>
    %66 = arith.addf %64, %65 : vector<2x32xf32>
    %67 = vector.extract_strided_slice %5 {offsets = [4, 0], sizes = [2, 96], strides = [1, 1]} : vector<16x96xf32> to vector<2x96xf32>
    %cst_17 = arith.constant dense<0.000000e+00> : vector<2x96xf32>
    %68 = tpu.matmul %66, %6, %cst_17 {dimension_numbers = #tpu.dot_dimension_numbers<[1], [0], [0], [1], [0, 0, 1, 1], [], []>} : vector<2x32xf32>, vector<32x96xf32>, vector<2x96xf32> -> vector<2x96xf32>
    %69 = arith.addf %68, %9 : vector<2x96xf32>
    %70 = vector.extract_strided_slice %67 {offsets = [0, 0], sizes = [2, 32], strides = [1, 1]} : vector<2x96xf32> to vector<2x32xf32>
    %71 = vector.extract_strided_slice %69 {offsets = [0, 0], sizes = [2, 32], strides = [1, 1]} : vector<2x96xf32> to vector<2x32xf32>
    %72 = arith.addf %70, %71 : vector<2x32xf32>
    %73 = arith.negf %72 : vector<2x32xf32>
    %74 = math.exp %73 : vector<2x32xf32>
    %cst_18 = arith.constant 1.000000e+00 : f32
    %75 = vector.broadcast %cst_18 : f32 to vector<2x32xf32>
    %76 = arith.addf %75, %74 : vector<2x32xf32>
    %77 = arith.divf %75, %76 : vector<2x32xf32>
    %78 = vector.extract_strided_slice %67 {offsets = [0, 32], sizes = [2, 32], strides = [1, 1]} : vector<2x96xf32> to vector<2x32xf32>
    %79 = vector.extract_strided_slice %69 {offsets = [0, 32], sizes = [2, 32], strides = [1, 1]} : vector<2x96xf32> to vector<2x32xf32>
    %80 = arith.addf %78, %79 : vector<2x32xf32>
    %81 = arith.negf %80 : vector<2x32xf32>
    %82 = math.exp %81 : vector<2x32xf32>
    %cst_19 = arith.constant 1.000000e+00 : f32
    %83 = vector.broadcast %cst_19 : f32 to vector<2x32xf32>
    %84 = arith.addf %83, %82 : vector<2x32xf32>
    %85 = arith.divf %83, %84 : vector<2x32xf32>
    %86 = vector.extract_strided_slice %67 {offsets = [0, 64], sizes = [2, 32], strides = [1, 1]} : vector<2x96xf32> to vector<2x32xf32>
    %87 = vector.extract_strided_slice %69 {offsets = [0, 64], sizes = [2, 32], strides = [1, 1]} : vector<2x96xf32> to vector<2x32xf32>
    %88 = arith.mulf %77, %87 : vector<2x32xf32>
    %89 = arith.addf %86, %88 : vector<2x32xf32>
    %90 = math.tanh %89 : vector<2x32xf32>
    %cst_20 = arith.constant 1.000000e+00 : f32
    %91 = vector.broadcast %cst_20 : f32 to vector<2x32xf32>
    %92 = arith.subf %91, %85 : vector<2x32xf32>
    %93 = arith.mulf %92, %90 : vector<2x32xf32>
    %94 = arith.mulf %85, %66 : vector<2x32xf32>
    %95 = arith.addf %93, %94 : vector<2x32xf32>
    %96 = vector.extract_strided_slice %5 {offsets = [6, 0], sizes = [2, 96], strides = [1, 1]} : vector<16x96xf32> to vector<2x96xf32>
    %cst_21 = arith.constant dense<0.000000e+00> : vector<2x96xf32>
    %97 = tpu.matmul %95, %6, %cst_21 {dimension_numbers = #tpu.dot_dimension_numbers<[1], [0], [0], [1], [0, 0, 1, 1], [], []>} : vector<2x32xf32>, vector<32x96xf32>, vector<2x96xf32> -> vector<2x96xf32>
    %98 = arith.addf %97, %9 : vector<2x96xf32>
    %99 = vector.extract_strided_slice %96 {offsets = [0, 0], sizes = [2, 32], strides = [1, 1]} : vector<2x96xf32> to vector<2x32xf32>
    %100 = vector.extract_strided_slice %98 {offsets = [0, 0], sizes = [2, 32], strides = [1, 1]} : vector<2x96xf32> to vector<2x32xf32>
    %101 = arith.addf %99, %100 : vector<2x32xf32>
    %102 = arith.negf %101 : vector<2x32xf32>
    %103 = math.exp %102 : vector<2x32xf32>
    %cst_22 = arith.constant 1.000000e+00 : f32
    %104 = vector.broadcast %cst_22 : f32 to vector<2x32xf32>
    %105 = arith.addf %104, %103 : vector<2x32xf32>
    %106 = arith.divf %104, %105 : vector<2x32xf32>
    %107 = vector.extract_strided_slice %96 {offsets = [0, 32], sizes = [2, 32], strides = [1, 1]} : vector<2x96xf32> to vector<2x32xf32>
    %108 = vector.extract_strided_slice %98 {offsets = [0, 32], sizes = [2, 32], strides = [1, 1]} : vector<2x96xf32> to vector<2x32xf32>
    %109 = arith.addf %107, %108 : vector<2x32xf32>
    %110 = arith.negf %109 : vector<2x32xf32>
    %111 = math.exp %110 : vector<2x32xf32>
    %cst_23 = arith.constant 1.000000e+00 : f32
    %112 = vector.broadcast %cst_23 : f32 to vector<2x32xf32>
    %113 = arith.addf %112, %111 : vector<2x32xf32>
    %114 = arith.divf %112, %113 : vector<2x32xf32>
    %115 = vector.extract_strided_slice %96 {offsets = [0, 64], sizes = [2, 32], strides = [1, 1]} : vector<2x96xf32> to vector<2x32xf32>
    %116 = vector.extract_strided_slice %98 {offsets = [0, 64], sizes = [2, 32], strides = [1, 1]} : vector<2x96xf32> to vector<2x32xf32>
    %117 = arith.mulf %106, %116 : vector<2x32xf32>
    %118 = arith.addf %115, %117 : vector<2x32xf32>
    %119 = math.tanh %118 : vector<2x32xf32>
    %cst_24 = arith.constant 1.000000e+00 : f32
    %120 = vector.broadcast %cst_24 : f32 to vector<2x32xf32>
    %121 = arith.subf %120, %114 : vector<2x32xf32>
    %122 = arith.mulf %121, %119 : vector<2x32xf32>
    %123 = arith.mulf %114, %95 : vector<2x32xf32>
    %124 = arith.addf %122, %123 : vector<2x32xf32>
    %125 = vector.extract_strided_slice %5 {offsets = [8, 0], sizes = [2, 96], strides = [1, 1]} : vector<16x96xf32> to vector<2x96xf32>
    %cst_25 = arith.constant dense<0.000000e+00> : vector<2x96xf32>
    %126 = tpu.matmul %124, %6, %cst_25 {dimension_numbers = #tpu.dot_dimension_numbers<[1], [0], [0], [1], [0, 0, 1, 1], [], []>} : vector<2x32xf32>, vector<32x96xf32>, vector<2x96xf32> -> vector<2x96xf32>
    %127 = arith.addf %126, %9 : vector<2x96xf32>
    %128 = vector.extract_strided_slice %125 {offsets = [0, 0], sizes = [2, 32], strides = [1, 1]} : vector<2x96xf32> to vector<2x32xf32>
    %129 = vector.extract_strided_slice %127 {offsets = [0, 0], sizes = [2, 32], strides = [1, 1]} : vector<2x96xf32> to vector<2x32xf32>
    %130 = arith.addf %128, %129 : vector<2x32xf32>
    %131 = arith.negf %130 : vector<2x32xf32>
    %132 = math.exp %131 : vector<2x32xf32>
    %cst_26 = arith.constant 1.000000e+00 : f32
    %133 = vector.broadcast %cst_26 : f32 to vector<2x32xf32>
    %134 = arith.addf %133, %132 : vector<2x32xf32>
    %135 = arith.divf %133, %134 : vector<2x32xf32>
    %136 = vector.extract_strided_slice %125 {offsets = [0, 32], sizes = [2, 32], strides = [1, 1]} : vector<2x96xf32> to vector<2x32xf32>
    %137 = vector.extract_strided_slice %127 {offsets = [0, 32], sizes = [2, 32], strides = [1, 1]} : vector<2x96xf32> to vector<2x32xf32>
    %138 = arith.addf %136, %137 : vector<2x32xf32>
    %139 = arith.negf %138 : vector<2x32xf32>
    %140 = math.exp %139 : vector<2x32xf32>
    %cst_27 = arith.constant 1.000000e+00 : f32
    %141 = vector.broadcast %cst_27 : f32 to vector<2x32xf32>
    %142 = arith.addf %141, %140 : vector<2x32xf32>
    %143 = arith.divf %141, %142 : vector<2x32xf32>
    %144 = vector.extract_strided_slice %125 {offsets = [0, 64], sizes = [2, 32], strides = [1, 1]} : vector<2x96xf32> to vector<2x32xf32>
    %145 = vector.extract_strided_slice %127 {offsets = [0, 64], sizes = [2, 32], strides = [1, 1]} : vector<2x96xf32> to vector<2x32xf32>
    %146 = arith.mulf %135, %145 : vector<2x32xf32>
    %147 = arith.addf %144, %146 : vector<2x32xf32>
    %148 = math.tanh %147 : vector<2x32xf32>
    %cst_28 = arith.constant 1.000000e+00 : f32
    %149 = vector.broadcast %cst_28 : f32 to vector<2x32xf32>
    %150 = arith.subf %149, %143 : vector<2x32xf32>
    %151 = arith.mulf %150, %148 : vector<2x32xf32>
    %152 = arith.mulf %143, %124 : vector<2x32xf32>
    %153 = arith.addf %151, %152 : vector<2x32xf32>
    %154 = vector.extract_strided_slice %5 {offsets = [10, 0], sizes = [2, 96], strides = [1, 1]} : vector<16x96xf32> to vector<2x96xf32>
    %cst_29 = arith.constant dense<0.000000e+00> : vector<2x96xf32>
    %155 = tpu.matmul %153, %6, %cst_29 {dimension_numbers = #tpu.dot_dimension_numbers<[1], [0], [0], [1], [0, 0, 1, 1], [], []>} : vector<2x32xf32>, vector<32x96xf32>, vector<2x96xf32> -> vector<2x96xf32>
    %156 = arith.addf %155, %9 : vector<2x96xf32>
    %157 = vector.extract_strided_slice %154 {offsets = [0, 0], sizes = [2, 32], strides = [1, 1]} : vector<2x96xf32> to vector<2x32xf32>
    %158 = vector.extract_strided_slice %156 {offsets = [0, 0], sizes = [2, 32], strides = [1, 1]} : vector<2x96xf32> to vector<2x32xf32>
    %159 = arith.addf %157, %158 : vector<2x32xf32>
    %160 = arith.negf %159 : vector<2x32xf32>
    %161 = math.exp %160 : vector<2x32xf32>
    %cst_30 = arith.constant 1.000000e+00 : f32
    %162 = vector.broadcast %cst_30 : f32 to vector<2x32xf32>
    %163 = arith.addf %162, %161 : vector<2x32xf32>
    %164 = arith.divf %162, %163 : vector<2x32xf32>
    %165 = vector.extract_strided_slice %154 {offsets = [0, 32], sizes = [2, 32], strides = [1, 1]} : vector<2x96xf32> to vector<2x32xf32>
    %166 = vector.extract_strided_slice %156 {offsets = [0, 32], sizes = [2, 32], strides = [1, 1]} : vector<2x96xf32> to vector<2x32xf32>
    %167 = arith.addf %165, %166 : vector<2x32xf32>
    %168 = arith.negf %167 : vector<2x32xf32>
    %169 = math.exp %168 : vector<2x32xf32>
    %cst_31 = arith.constant 1.000000e+00 : f32
    %170 = vector.broadcast %cst_31 : f32 to vector<2x32xf32>
    %171 = arith.addf %170, %169 : vector<2x32xf32>
    %172 = arith.divf %170, %171 : vector<2x32xf32>
    %173 = vector.extract_strided_slice %154 {offsets = [0, 64], sizes = [2, 32], strides = [1, 1]} : vector<2x96xf32> to vector<2x32xf32>
    %174 = vector.extract_strided_slice %156 {offsets = [0, 64], sizes = [2, 32], strides = [1, 1]} : vector<2x96xf32> to vector<2x32xf32>
    %175 = arith.mulf %164, %174 : vector<2x32xf32>
    %176 = arith.addf %173, %175 : vector<2x32xf32>
    %177 = math.tanh %176 : vector<2x32xf32>
    %cst_32 = arith.constant 1.000000e+00 : f32
    %178 = vector.broadcast %cst_32 : f32 to vector<2x32xf32>
    %179 = arith.subf %178, %172 : vector<2x32xf32>
    %180 = arith.mulf %179, %177 : vector<2x32xf32>
    %181 = arith.mulf %172, %153 : vector<2x32xf32>
    %182 = arith.addf %180, %181 : vector<2x32xf32>
    %183 = vector.extract_strided_slice %5 {offsets = [12, 0], sizes = [2, 96], strides = [1, 1]} : vector<16x96xf32> to vector<2x96xf32>
    %cst_33 = arith.constant dense<0.000000e+00> : vector<2x96xf32>
    %184 = tpu.matmul %182, %6, %cst_33 {dimension_numbers = #tpu.dot_dimension_numbers<[1], [0], [0], [1], [0, 0, 1, 1], [], []>} : vector<2x32xf32>, vector<32x96xf32>, vector<2x96xf32> -> vector<2x96xf32>
    %185 = arith.addf %184, %9 : vector<2x96xf32>
    %186 = vector.extract_strided_slice %183 {offsets = [0, 0], sizes = [2, 32], strides = [1, 1]} : vector<2x96xf32> to vector<2x32xf32>
    %187 = vector.extract_strided_slice %185 {offsets = [0, 0], sizes = [2, 32], strides = [1, 1]} : vector<2x96xf32> to vector<2x32xf32>
    %188 = arith.addf %186, %187 : vector<2x32xf32>
    %189 = arith.negf %188 : vector<2x32xf32>
    %190 = math.exp %189 : vector<2x32xf32>
    %cst_34 = arith.constant 1.000000e+00 : f32
    %191 = vector.broadcast %cst_34 : f32 to vector<2x32xf32>
    %192 = arith.addf %191, %190 : vector<2x32xf32>
    %193 = arith.divf %191, %192 : vector<2x32xf32>
    %194 = vector.extract_strided_slice %183 {offsets = [0, 32], sizes = [2, 32], strides = [1, 1]} : vector<2x96xf32> to vector<2x32xf32>
    %195 = vector.extract_strided_slice %185 {offsets = [0, 32], sizes = [2, 32], strides = [1, 1]} : vector<2x96xf32> to vector<2x32xf32>
    %196 = arith.addf %194, %195 : vector<2x32xf32>
    %197 = arith.negf %196 : vector<2x32xf32>
    %198 = math.exp %197 : vector<2x32xf32>
    %cst_35 = arith.constant 1.000000e+00 : f32
    %199 = vector.broadcast %cst_35 : f32 to vector<2x32xf32>
    %200 = arith.addf %199, %198 : vector<2x32xf32>
    %201 = arith.divf %199, %200 : vector<2x32xf32>
    %202 = vector.extract_strided_slice %183 {offsets = [0, 64], sizes = [2, 32], strides = [1, 1]} : vector<2x96xf32> to vector<2x32xf32>
    %203 = vector.extract_strided_slice %185 {offsets = [0, 64], sizes = [2, 32], strides = [1, 1]} : vector<2x96xf32> to vector<2x32xf32>
    %204 = arith.mulf %193, %203 : vector<2x32xf32>
    %205 = arith.addf %202, %204 : vector<2x32xf32>
    %206 = math.tanh %205 : vector<2x32xf32>
    %cst_36 = arith.constant 1.000000e+00 : f32
    %207 = vector.broadcast %cst_36 : f32 to vector<2x32xf32>
    %208 = arith.subf %207, %201 : vector<2x32xf32>
    %209 = arith.mulf %208, %206 : vector<2x32xf32>
    %210 = arith.mulf %201, %182 : vector<2x32xf32>
    %211 = arith.addf %209, %210 : vector<2x32xf32>
    %212 = vector.extract_strided_slice %5 {offsets = [14, 0], sizes = [2, 96], strides = [1, 1]} : vector<16x96xf32> to vector<2x96xf32>
    %cst_37 = arith.constant dense<0.000000e+00> : vector<2x96xf32>
    %213 = tpu.matmul %211, %6, %cst_37 {dimension_numbers = #tpu.dot_dimension_numbers<[1], [0], [0], [1], [0, 0, 1, 1], [], []>} : vector<2x32xf32>, vector<32x96xf32>, vector<2x96xf32> -> vector<2x96xf32>
    %214 = arith.addf %213, %9 : vector<2x96xf32>
    %215 = vector.extract_strided_slice %212 {offsets = [0, 0], sizes = [2, 32], strides = [1, 1]} : vector<2x96xf32> to vector<2x32xf32>
    %216 = vector.extract_strided_slice %214 {offsets = [0, 0], sizes = [2, 32], strides = [1, 1]} : vector<2x96xf32> to vector<2x32xf32>
    %217 = arith.addf %215, %216 : vector<2x32xf32>
    %218 = arith.negf %217 : vector<2x32xf32>
    %219 = math.exp %218 : vector<2x32xf32>
    %cst_38 = arith.constant 1.000000e+00 : f32
    %220 = vector.broadcast %cst_38 : f32 to vector<2x32xf32>
    %221 = arith.addf %220, %219 : vector<2x32xf32>
    %222 = arith.divf %220, %221 : vector<2x32xf32>
    %223 = vector.extract_strided_slice %212 {offsets = [0, 32], sizes = [2, 32], strides = [1, 1]} : vector<2x96xf32> to vector<2x32xf32>
    %224 = vector.extract_strided_slice %214 {offsets = [0, 32], sizes = [2, 32], strides = [1, 1]} : vector<2x96xf32> to vector<2x32xf32>
    %225 = arith.addf %223, %224 : vector<2x32xf32>
    %226 = arith.negf %225 : vector<2x32xf32>
    %227 = math.exp %226 : vector<2x32xf32>
    %cst_39 = arith.constant 1.000000e+00 : f32
    %228 = vector.broadcast %cst_39 : f32 to vector<2x32xf32>
    %229 = arith.addf %228, %227 : vector<2x32xf32>
    %230 = arith.divf %228, %229 : vector<2x32xf32>
    %231 = vector.extract_strided_slice %212 {offsets = [0, 64], sizes = [2, 32], strides = [1, 1]} : vector<2x96xf32> to vector<2x32xf32>
    %232 = vector.extract_strided_slice %214 {offsets = [0, 64], sizes = [2, 32], strides = [1, 1]} : vector<2x96xf32> to vector<2x32xf32>
    %233 = arith.mulf %222, %232 : vector<2x32xf32>
    %234 = arith.addf %231, %233 : vector<2x32xf32>
    %235 = math.tanh %234 : vector<2x32xf32>
    %cst_40 = arith.constant 1.000000e+00 : f32
    %236 = vector.broadcast %cst_40 : f32 to vector<2x32xf32>
    %237 = arith.subf %236, %230 : vector<2x32xf32>
    %238 = arith.mulf %237, %235 : vector<2x32xf32>
    %239 = arith.mulf %230, %211 : vector<2x32xf32>
    %240 = arith.addf %238, %239 : vector<2x32xf32>
    %c0_41 = arith.constant 0 : index
    %c0_42 = arith.constant 0 : index
    %241 = vector.load %arg5[%c0_41, %c0_42] : memref<32x192xf32, #tpu.memory_space<vmem>>, vector<32x192xf32>
    %c0_43 = arith.constant 0 : index
    %c0_44 = arith.constant 0 : index
    %242 = vector.load %arg6[%c0_43, %c0_44] : memref<1x96xf32, #tpu.memory_space<vmem>>, vector<1x96xf32>
    %243 = vector.shape_cast %242 : vector<1x96xf32> to vector<1x96xf32>
    %244 = vector.broadcast %243 : vector<1x96xf32> to vector<2x96xf32>
    %c0_45 = arith.constant 0 : index
    %c0_46 = arith.constant 0 : index
    %245 = vector.load %arg7[%c0_45, %c0_46] : memref<1x96xf32, #tpu.memory_space<vmem>>, vector<1x96xf32>
    %246 = vector.shape_cast %245 : vector<1x96xf32> to vector<1x96xf32>
    %247 = vector.broadcast %246 : vector<1x96xf32> to vector<2x96xf32>
    %c0_47 = arith.constant 0 : index
    %c0_48 = arith.constant 0 : index
    %248 = vector.load %arg8[%c0_47, %c0_48] : memref<1x96xf32, #tpu.memory_space<vmem>>, vector<1x96xf32>
    %249 = vector.shape_cast %248 : vector<1x96xf32> to vector<1x96xf32>
    %250 = vector.broadcast %249 : vector<1x96xf32> to vector<2x96xf32>
    %cst_49 = arith.constant dense<0.000000e+00> : vector<2x192xf32>
    %251 = tpu.matmul %240, %241, %cst_49 {dimension_numbers = #tpu.dot_dimension_numbers<[1], [0], [0], [1], [0, 0, 1, 1], [], []>} : vector<2x32xf32>, vector<32x192xf32>, vector<2x192xf32> -> vector<2x192xf32>
    %252 = vector.extract_strided_slice %251 {offsets = [0, 96], sizes = [2, 96], strides = [1, 1]} : vector<2x192xf32> to vector<2x96xf32>
    %253 = arith.addf %252, %250 : vector<2x96xf32>
    %254 = vector.extract_strided_slice %244 {offsets = [0, 0], sizes = [2, 32], strides = [1, 1]} : vector<2x96xf32> to vector<2x32xf32>
    %255 = vector.extract_strided_slice %253 {offsets = [0, 0], sizes = [2, 32], strides = [1, 1]} : vector<2x96xf32> to vector<2x32xf32>
    %256 = arith.addf %254, %255 : vector<2x32xf32>
    %257 = arith.negf %256 : vector<2x32xf32>
    %258 = math.exp %257 : vector<2x32xf32>
    %cst_50 = arith.constant 1.000000e+00 : f32
    %259 = vector.broadcast %cst_50 : f32 to vector<2x32xf32>
    %260 = arith.addf %259, %258 : vector<2x32xf32>
    %261 = arith.divf %259, %260 : vector<2x32xf32>
    %262 = vector.extract_strided_slice %244 {offsets = [0, 32], sizes = [2, 32], strides = [1, 1]} : vector<2x96xf32> to vector<2x32xf32>
    %263 = vector.extract_strided_slice %253 {offsets = [0, 32], sizes = [2, 32], strides = [1, 1]} : vector<2x96xf32> to vector<2x32xf32>
    %264 = arith.addf %262, %263 : vector<2x32xf32>
    %265 = arith.negf %264 : vector<2x32xf32>
    %266 = math.exp %265 : vector<2x32xf32>
    %cst_51 = arith.constant 1.000000e+00 : f32
    %267 = vector.broadcast %cst_51 : f32 to vector<2x32xf32>
    %268 = arith.addf %267, %266 : vector<2x32xf32>
    %269 = arith.divf %267, %268 : vector<2x32xf32>
    %270 = vector.extract_strided_slice %244 {offsets = [0, 64], sizes = [2, 32], strides = [1, 1]} : vector<2x96xf32> to vector<2x32xf32>
    %271 = vector.extract_strided_slice %253 {offsets = [0, 64], sizes = [2, 32], strides = [1, 1]} : vector<2x96xf32> to vector<2x32xf32>
    %272 = arith.mulf %261, %271 : vector<2x32xf32>
    %273 = arith.addf %270, %272 : vector<2x32xf32>
    %274 = math.tanh %273 : vector<2x32xf32>
    %cst_52 = arith.constant 1.000000e+00 : f32
    %275 = vector.broadcast %cst_52 : f32 to vector<2x32xf32>
    %276 = arith.subf %275, %269 : vector<2x32xf32>
    %277 = arith.mulf %276, %274 : vector<2x32xf32>
    %278 = arith.mulf %269, %240 : vector<2x32xf32>
    %279 = arith.addf %277, %278 : vector<2x32xf32>
    %cst_53 = arith.constant dense<0.000000e+00> : vector<2x192xf32>
    %280 = tpu.matmul %279, %241, %cst_53 {dimension_numbers = #tpu.dot_dimension_numbers<[1], [0], [0], [1], [0, 0, 1, 1], [], []>} : vector<2x32xf32>, vector<32x192xf32>, vector<2x192xf32> -> vector<2x192xf32>
    %281 = vector.extract_strided_slice %280 {offsets = [0, 0], sizes = [2, 96], strides = [1, 1]} : vector<2x192xf32> to vector<2x96xf32>
    %282 = arith.addf %281, %247 : vector<2x96xf32>
    %283 = vector.extract_strided_slice %280 {offsets = [0, 96], sizes = [2, 96], strides = [1, 1]} : vector<2x192xf32> to vector<2x96xf32>
    %284 = arith.addf %283, %250 : vector<2x96xf32>
    %285 = vector.extract_strided_slice %282 {offsets = [0, 0], sizes = [2, 32], strides = [1, 1]} : vector<2x96xf32> to vector<2x32xf32>
    %286 = vector.extract_strided_slice %284 {offsets = [0, 0], sizes = [2, 32], strides = [1, 1]} : vector<2x96xf32> to vector<2x32xf32>
    %287 = arith.addf %285, %286 : vector<2x32xf32>
    %288 = arith.negf %287 : vector<2x32xf32>
    %289 = math.exp %288 : vector<2x32xf32>
    %cst_54 = arith.constant 1.000000e+00 : f32
    %290 = vector.broadcast %cst_54 : f32 to vector<2x32xf32>
    %291 = arith.addf %290, %289 : vector<2x32xf32>
    %292 = arith.divf %290, %291 : vector<2x32xf32>
    %293 = vector.extract_strided_slice %282 {offsets = [0, 32], sizes = [2, 32], strides = [1, 1]} : vector<2x96xf32> to vector<2x32xf32>
    %294 = vector.extract_strided_slice %284 {offsets = [0, 32], sizes = [2, 32], strides = [1, 1]} : vector<2x96xf32> to vector<2x32xf32>
    %295 = arith.addf %293, %294 : vector<2x32xf32>
    %296 = arith.negf %295 : vector<2x32xf32>
    %297 = math.exp %296 : vector<2x32xf32>
    %cst_55 = arith.constant 1.000000e+00 : f32
    %298 = vector.broadcast %cst_55 : f32 to vector<2x32xf32>
    %299 = arith.addf %298, %297 : vector<2x32xf32>
    %300 = arith.divf %298, %299 : vector<2x32xf32>
    %301 = vector.extract_strided_slice %282 {offsets = [0, 64], sizes = [2, 32], strides = [1, 1]} : vector<2x96xf32> to vector<2x32xf32>
    %302 = vector.extract_strided_slice %284 {offsets = [0, 64], sizes = [2, 32], strides = [1, 1]} : vector<2x96xf32> to vector<2x32xf32>
    %303 = arith.mulf %292, %302 : vector<2x32xf32>
    %304 = arith.addf %301, %303 : vector<2x32xf32>
    %305 = math.tanh %304 : vector<2x32xf32>
    %cst_56 = arith.constant 1.000000e+00 : f32
    %306 = vector.broadcast %cst_56 : f32 to vector<2x32xf32>
    %307 = arith.subf %306, %300 : vector<2x32xf32>
    %308 = arith.mulf %307, %305 : vector<2x32xf32>
    %309 = arith.mulf %300, %279 : vector<2x32xf32>
    %310 = arith.addf %308, %309 : vector<2x32xf32>
    %cst_57 = arith.constant dense<0.000000e+00> : vector<2x192xf32>
    %311 = tpu.matmul %310, %241, %cst_57 {dimension_numbers = #tpu.dot_dimension_numbers<[1], [0], [0], [1], [0, 0, 1, 1], [], []>} : vector<2x32xf32>, vector<32x192xf32>, vector<2x192xf32> -> vector<2x192xf32>
    %312 = vector.extract_strided_slice %311 {offsets = [0, 0], sizes = [2, 96], strides = [1, 1]} : vector<2x192xf32> to vector<2x96xf32>
    %313 = arith.addf %312, %247 : vector<2x96xf32>
    %314 = vector.extract_strided_slice %311 {offsets = [0, 96], sizes = [2, 96], strides = [1, 1]} : vector<2x192xf32> to vector<2x96xf32>
    %315 = arith.addf %314, %250 : vector<2x96xf32>
    %316 = vector.extract_strided_slice %313 {offsets = [0, 0], sizes = [2, 32], strides = [1, 1]} : vector<2x96xf32> to vector<2x32xf32>
    %317 = vector.extract_strided_slice %315 {offsets = [0, 0], sizes = [2, 32], strides = [1, 1]} : vector<2x96xf32> to vector<2x32xf32>
    %318 = arith.addf %316, %317 : vector<2x32xf32>
    %319 = arith.negf %318 : vector<2x32xf32>
    %320 = math.exp %319 : vector<2x32xf32>
    %cst_58 = arith.constant 1.000000e+00 : f32
    %321 = vector.broadcast %cst_58 : f32 to vector<2x32xf32>
    %322 = arith.addf %321, %320 : vector<2x32xf32>
    %323 = arith.divf %321, %322 : vector<2x32xf32>
    %324 = vector.extract_strided_slice %313 {offsets = [0, 32], sizes = [2, 32], strides = [1, 1]} : vector<2x96xf32> to vector<2x32xf32>
    %325 = vector.extract_strided_slice %315 {offsets = [0, 32], sizes = [2, 32], strides = [1, 1]} : vector<2x96xf32> to vector<2x32xf32>
    %326 = arith.addf %324, %325 : vector<2x32xf32>
    %327 = arith.negf %326 : vector<2x32xf32>
    %328 = math.exp %327 : vector<2x32xf32>
    %cst_59 = arith.constant 1.000000e+00 : f32
    %329 = vector.broadcast %cst_59 : f32 to vector<2x32xf32>
    %330 = arith.addf %329, %328 : vector<2x32xf32>
    %331 = arith.divf %329, %330 : vector<2x32xf32>
    %332 = vector.extract_strided_slice %313 {offsets = [0, 64], sizes = [2, 32], strides = [1, 1]} : vector<2x96xf32> to vector<2x32xf32>
    %333 = vector.extract_strided_slice %315 {offsets = [0, 64], sizes = [2, 32], strides = [1, 1]} : vector<2x96xf32> to vector<2x32xf32>
    %334 = arith.mulf %323, %333 : vector<2x32xf32>
    %335 = arith.addf %332, %334 : vector<2x32xf32>
    %336 = math.tanh %335 : vector<2x32xf32>
    %cst_60 = arith.constant 1.000000e+00 : f32
    %337 = vector.broadcast %cst_60 : f32 to vector<2x32xf32>
    %338 = arith.subf %337, %331 : vector<2x32xf32>
    %339 = arith.mulf %338, %336 : vector<2x32xf32>
    %340 = arith.mulf %331, %310 : vector<2x32xf32>
    %341 = arith.addf %339, %340 : vector<2x32xf32>
    %cst_61 = arith.constant dense<0.000000e+00> : vector<2x192xf32>
    %342 = tpu.matmul %341, %241, %cst_61 {dimension_numbers = #tpu.dot_dimension_numbers<[1], [0], [0], [1], [0, 0, 1, 1], [], []>} : vector<2x32xf32>, vector<32x192xf32>, vector<2x192xf32> -> vector<2x192xf32>
    %343 = vector.extract_strided_slice %342 {offsets = [0, 0], sizes = [2, 96], strides = [1, 1]} : vector<2x192xf32> to vector<2x96xf32>
    %344 = arith.addf %343, %247 : vector<2x96xf32>
    %345 = vector.extract_strided_slice %342 {offsets = [0, 96], sizes = [2, 96], strides = [1, 1]} : vector<2x192xf32> to vector<2x96xf32>
    %346 = arith.addf %345, %250 : vector<2x96xf32>
    %347 = vector.extract_strided_slice %344 {offsets = [0, 0], sizes = [2, 32], strides = [1, 1]} : vector<2x96xf32> to vector<2x32xf32>
    %348 = vector.extract_strided_slice %346 {offsets = [0, 0], sizes = [2, 32], strides = [1, 1]} : vector<2x96xf32> to vector<2x32xf32>
    %349 = arith.addf %347, %348 : vector<2x32xf32>
    %350 = arith.negf %349 : vector<2x32xf32>
    %351 = math.exp %350 : vector<2x32xf32>
    %cst_62 = arith.constant 1.000000e+00 : f32
    %352 = vector.broadcast %cst_62 : f32 to vector<2x32xf32>
    %353 = arith.addf %352, %351 : vector<2x32xf32>
    %354 = arith.divf %352, %353 : vector<2x32xf32>
    %355 = vector.extract_strided_slice %344 {offsets = [0, 32], sizes = [2, 32], strides = [1, 1]} : vector<2x96xf32> to vector<2x32xf32>
    %356 = vector.extract_strided_slice %346 {offsets = [0, 32], sizes = [2, 32], strides = [1, 1]} : vector<2x96xf32> to vector<2x32xf32>
    %357 = arith.addf %355, %356 : vector<2x32xf32>
    %358 = arith.negf %357 : vector<2x32xf32>
    %359 = math.exp %358 : vector<2x32xf32>
    %cst_63 = arith.constant 1.000000e+00 : f32
    %360 = vector.broadcast %cst_63 : f32 to vector<2x32xf32>
    %361 = arith.addf %360, %359 : vector<2x32xf32>
    %362 = arith.divf %360, %361 : vector<2x32xf32>
    %363 = vector.extract_strided_slice %344 {offsets = [0, 64], sizes = [2, 32], strides = [1, 1]} : vector<2x96xf32> to vector<2x32xf32>
    %364 = vector.extract_strided_slice %346 {offsets = [0, 64], sizes = [2, 32], strides = [1, 1]} : vector<2x96xf32> to vector<2x32xf32>
    %365 = arith.mulf %354, %364 : vector<2x32xf32>
    %366 = arith.addf %363, %365 : vector<2x32xf32>
    %367 = math.tanh %366 : vector<2x32xf32>
    %cst_64 = arith.constant 1.000000e+00 : f32
    %368 = vector.broadcast %cst_64 : f32 to vector<2x32xf32>
    %369 = arith.subf %368, %362 : vector<2x32xf32>
    %370 = arith.mulf %369, %367 : vector<2x32xf32>
    %371 = arith.mulf %362, %341 : vector<2x32xf32>
    %372 = arith.addf %370, %371 : vector<2x32xf32>
    %373 = tpu.concatenate %279, %310, %341, %372 in 1 : vector<2x32xf32>, vector<2x32xf32>, vector<2x32xf32>, vector<2x32xf32> -> vector<2x128xf32>
    %c0_65 = arith.constant 0 : index
    %c0_66 = arith.constant 0 : index
    %374 = vector.load %arg9[%c0_65, %c0_66] : memref<128x32xf32, #tpu.memory_space<vmem>>, vector<128x32xf32>
    %cst_67 = arith.constant dense<0.000000e+00> : vector<2x32xf32>
    %375 = tpu.matmul %373, %374, %cst_67 {dimension_numbers = #tpu.dot_dimension_numbers<[1], [0], [0], [1], [0, 0, 1, 1], [], []>} : vector<2x128xf32>, vector<128x32xf32>, vector<2x32xf32> -> vector<2x32xf32>
    %c0_68 = arith.constant 0 : index
    %c0_69 = arith.constant 0 : index
    %376 = vector.load %arg10[%c0_68, %c0_69] : memref<1x32xf32, #tpu.memory_space<vmem>>, vector<1x32xf32>
    %377 = vector.broadcast %376 : vector<1x32xf32> to vector<2x32xf32>
    %378 = arith.addf %375, %377 : vector<2x32xf32>
    %c0_70 = arith.constant 0 : index
    %c0_71 = arith.constant 0 : index
    %379 = vector.load %arg11[%c0_70, %c0_71] : memref<2x32xf32, #tpu.memory_space<vmem>>, vector<2x32xf32>
    tpu.vector_store %arg11[%c0_70, %c0_71], %378 {strides = array<i32>} : memref<2x32xf32, #tpu.memory_space<vmem>>, vector<2x32xf32>,
    return
  }
}

</mosaic_0001>

<llo_original>
// kernel: tpu_custom_call.1
$region0: #{tpu_custom_call.1}
  #allocation0 [shape = 'u32[]', space=smem, size = 0x4, offset = 0x4, fixed_abs, tag = 'smem constant byte address 0x4 - core index']
  #allocation1 [shape = 'u32[144,128]{1,0:T(1,128)}', space=vmem, size = 0x12000, scoped, tag = 'internal scratch']
  %s0 = inlined_call_operand.vmem [shape: f32[16,8], index: 0, kind: input, shape index: {}]
  %s1 = inlined_call_operand.vmem [shape: f32[8,96], index: 1, kind: input, shape index: {}]
  %s2 = inlined_call_operand.vmem [shape: f32[32,96], index: 2, kind: input, shape index: {}]
  %s3 = inlined_call_operand.vmem [shape: f32[1,96], index: 3, kind: input, shape index: {}]
  %s4 = inlined_call_operand.vmem [shape: f32[1,96], index: 4, kind: input, shape index: {}]
  %s5 = inlined_call_operand.vmem [shape: f32[32,192], index: 5, kind: input, shape index: {}]
  %s6 = inlined_call_operand.vmem [shape: f32[1,96], index: 6, kind: input, shape index: {}]
  %s7 = inlined_call_operand.vmem [shape: f32[1,96], index: 7, kind: input, shape index: {}]
  %s8 = inlined_call_operand.vmem [shape: f32[1,96], index: 8, kind: input, shape index: {}]
  %s9 = inlined_call_operand.vmem [shape: f32[128,32], index: 9, kind: input, shape index: {}]
  %s10 = inlined_call_operand.vmem [shape: f32[1,32], index: 10, kind: input, shape index: {}]
  %s11 = inlined_call_operand.hbm [shape: f32[2,32], index: 11, kind: output, shape index: {}]
  %s12 = sld [smem:[#allocation0]]
  $region54: #{tpu_custom_call.1} parent=0
    _
  %s14 = ssub.s32 1, %s12
  %s15 = scalar_select 0, %s14, %s12
  $region1: #{tpu_custom_call.1} parent=0
    #allocation2 [shape = 'u8[1024]{0}', space=vmem, size = 0x400, scoped, tag = 'output window, operand 0, single buffered']
    #allocation3 [shape = 's32[1]{0}', space=sflag, size = 0x4, scoped, tag = 'scoped memory for tpu_custom_call.1']
    %16 = vsyncpa [#allocation3], 0
    // Predicated region
    $region2: #{tpu_custom_call.1} parent=1 // pred_check
      _
    $region3: #{tpu_custom_call.1} parent=1 // pred_check_branch
      %18 = sbr.rel (0) target = $region5
    $region4: #{tpu_custom_call.1} parent=1 // pred_region
      _
    $region5: #{tpu_custom_call.1} parent=1 // pred_fallthru
      _
    // Predicated region
    $region6: #{tpu_custom_call.1} parent=1 // pred_check
      _
    $region7: #{tpu_custom_call.1} parent=1 // pred_check_branch
      %20 = sbr.rel (0) target = $region9
    $region8: #{tpu_custom_call.1} parent=1 // pred_region
      _
    $region9: #{tpu_custom_call.1} parent=1 // pred_fallthru
      _
    // Predicated region
    $region10: #{tpu_custom_call.1} parent=1 // pred_check
      _
    $region11: #{tpu_custom_call.1} parent=1 // pred_check_branch
      %22 = sbr.rel (0) target = $region13
    $region12: #{tpu_custom_call.1} parent=1 // pred_region
      _
    $region13: #{tpu_custom_call.1} parent=1 // pred_fallthru
      _
    // Predicated region
    $region14: #{tpu_custom_call.1} parent=1 // pred_check
      _
    $region15: #{tpu_custom_call.1} parent=1 // pred_check_branch
      %24 = sbr.rel (0) target = $region17
    $region16: #{tpu_custom_call.1} parent=1 // pred_region
      _
    $region17: #{tpu_custom_call.1} parent=1 // pred_fallthru
      _
    // Predicated region
    $region18: #{tpu_custom_call.1} parent=1 // pred_check
      _
    $region19: #{tpu_custom_call.1} parent=1 // pred_check_branch
      %26 = sbr.rel (0) target = $region21
    $region20: #{tpu_custom_call.1} parent=1 // pred_region
      _
    $region21: #{tpu_custom_call.1} parent=1 // pred_fallthru
      _
    // Predicated region
    $region22: #{tpu_custom_call.1} parent=1 // pred_check
      _
    $region23: #{tpu_custom_call.1} parent=1 // pred_check_branch
      %28 = sbr.rel (0) target = $region25
    $region24: #{tpu_custom_call.1} parent=1 // pred_region
      _
    $region25: #{tpu_custom_call.1} parent=1 // pred_fallthru
      _
    // Predicated region
    $region26: #{tpu_custom_call.1} parent=1 // pred_check
      _
    $region27: #{tpu_custom_call.1} parent=1 // pred_check_branch
      %30 = sbr.rel (0) target = $region29
    $region28: #{tpu_custom_call.1} parent=1 // pred_region
      _
    $region29: #{tpu_custom_call.1} parent=1 // pred_fallthru
      _
    // Predicated region
    $region30: #{tpu_custom_call.1} parent=1 // pred_check
      _
    $region31: #{tpu_custom_call.1} parent=1 // pred_check_branch
      %32 = sbr.rel (0) target = $region33
    $region32: #{tpu_custom_call.1} parent=1 // pred_region
      _
    $region33: #{tpu_custom_call.1} parent=1 // pred_fallthru
      _
    // Predicated region
    $region34: #{tpu_custom_call.1} parent=1 // pred_check
      _
    $region35: #{tpu_custom_call.1} parent=1 // pred_check_branch
      %34 = sbr.rel (0) target = $region37
    $region36: #{tpu_custom_call.1} parent=1 // pred_region
      _
    $region37: #{tpu_custom_call.1} parent=1 // pred_fallthru
      _
    // Predicated region
    $region38: #{tpu_custom_call.1} parent=1 // pred_check
      _
    $region39: #{tpu_custom_call.1} parent=1 // pred_check_branch
      %36 = sbr.rel (0) target = $region41
    $region40: #{tpu_custom_call.1} parent=1 // pred_region
      _
    $region41: #{tpu_custom_call.1} parent=1 // pred_fallthru
      _
    // Predicated region
    $region42: #{tpu_custom_call.1} parent=1 // pred_check
      _
    $region43: #{tpu_custom_call.1} parent=1 // pred_check_branch
      %38 = sbr.rel (0) target = $region45
    $region44: #{tpu_custom_call.1} parent=1 // pred_region
      _
    $region45: #{tpu_custom_call.1} parent=1 // pred_fallthru
      _
    %v39 = vld [vmem:[%s0] sm:$0xff]
    %v40 = vld [vmem:[%s0 + $0x8] sm:$0xff]
    %v41 = vld [vmem:[%s1] sm:$0xff]
    %v42 = vld [vmem:[%s3] sm:$0x1]
    %v44 = vlaneseq
    %v45 = vshrl.u32 %v44, 7
    %v46 = vsub.s32 0, %v45
    %v47 = vrot.slane %v42, %v46
    %vm49 = vcmask 64512
    %v51 = vsel %vm49, %v39, 0
    %v54 = vsel %vm49, %v40, 0
    %56 = vmatprep.subr.mxu0 0.0
    %57 = vmatpush1.msra.mxu0 %v41
    %58 = vmatprep.subr.mxu0 0.0
    %59 = vmatpush1.msra.mxu0 0.0
    %60 = vmatprep.subr.mxu0 0.0
    %61 = vmatpush1.msra.mxu0 0.0
    %62 = vmatprep.subr.mxu0 0.0
    %63 = vmatpush1.msra.mxu0 0.0
    %64 = vmatprep.subr.mxu0 0.0
    %65 = vmatpush1.msra.mxu0 0.0
    %66 = vmatprep.subr.mxu0 0.0
    %67 = vmatpush1.msra.mxu0 0.0
    %68 = vmatprep.subr.mxu0 0.0
    %69 = vmatpush1.msra.mxu0 0.0
    %70 = vmatprep.subr.mxu0 0.0
    %71 = vmatpush1.msra.mxu0 0.0
    %72 = vmatprep.subr.mxu0 0.0
    %73 = vmatpush1.msra.mxu0 0.0
    %74 = vmatprep.subr.mxu0 0.0
    %75 = vmatpush1.msra.mxu0 0.0
    %76 = vmatprep.subr.mxu0 0.0
    %77 = vmatpush1.msra.mxu0 0.0
    %78 = vmatprep.subr.mxu0 0.0
    %79 = vmatpush1.msra.mxu0 0.0
    %80 = vmatprep.subr.mxu0 0.0
    %81 = vmatpush1.msra.mxu0 0.0
    %82 = vmatprep.subr.mxu0 0.0
    %83 = vmatpush1.msra.mxu0 0.0
    %84 = vmatprep.subr.mxu0 0.0
    %85 = vmatpush1.msra.mxu0 0.0
    %86 = vmatprep.subr.mxu0 0.0
    %87 = vmatpush1.msra.mxu0 0.0
    %88 = vmatprep.subr.mxu0 0.0
    %89 = vmatpush1.msra.mxu0 0.0
    %90 = vmatprep.subr.mxu0 0.0
    %91 = vmatpush1.msra.mxu0 0.0
    %92 = vmatprep.subr.mxu0 0.0
    %93 = vmatpush1.msra.mxu0 0.0
    %94 = vmatprep.subr.mxu0 0.0
    %95 = vmatpush1.msra.mxu0 0.0
    %96 = vmatprep.subr.mxu0 0.0
    %97 = vmatpush1.msra.mxu0 0.0
    %98 = vmatprep.subr.mxu0 0.0
    %99 = vmatpush1.msra.mxu0 0.0
    %100 = vmatprep.subr.mxu0 0.0
    %101 = vmatpush1.msra.mxu0 0.0
    %102 = vmatprep.subr.mxu0 0.0
    %103 = vmatpush1.msra.mxu0 0.0
    %104 = vmatprep.subr.mxu0 0.0
    %105 = vmatpush1.msra.mxu0 0.0
    %106 = vmatprep.subr.mxu0 0.0
    %107 = vmatpush1.msra.mxu0 0.0
    %108 = vmatprep.subr.mxu0 0.0
    %109 = vmatpush1.msra.mxu0 0.0
    %110 = vmatprep.subr.mxu0 0.0
    %111 = vmatpush1.msra.mxu0 0.0
    %112 = vmatprep.subr.mxu0 0.0
    %113 = vmatpush1.msra.mxu0 0.0
    %114 = vmatprep.subr.mxu0 0.0
    %115 = vmatpush1.msra.mxu0 0.0
    %116 = vmatprep.subr.mxu0 0.0
    %117 = vmatpush1.msra.mxu0 0.0
    %118 = vmatprep.subr.mxu0 0.0
    %119 = vmatpush1.msra.mxu0 0.0
    %120 = vmatprep.mubr.f32.mxu0 0.0
    %121 = vmatmul.mubr.f32.gmra.mrb[0].mxu0 %v51
    %v122 = vpop.f32.mrb[0].mxu0
    %v123 = vadd.f32 %v47, %v122
    %v124 = vpop.f32.mrb[0].mxu0
    %125 = vmatprep.mubr.f32.mxu0 0.0
    %126 = vmatmul.mubr.f32.gmra.mrb[0].mxu0 %v54
    %v127 = vpop.f32.mrb[0].mxu0
    %v128 = vadd.f32 %v47, %v127
    %v129 = vpop.f32.mrb[0].mxu0
    %130 = vdwg.mxu0
    %v131 = vld [vmem:[%s2] sm:$0xff]
    %v132 = vld [vmem:[%s2 + $0x8] sm:$0xff]
    %v133 = vld [vmem:[%s2 + $0x10] sm:$0xff]
    %v134 = vld [vmem:[%s2 + $0x18] sm:$0xff]
    %v135 = vld [vmem:[%s4] sm:$0x1]
    %v137 = vlaneseq
    %v138 = vshrl.u32 %v137, 7
    %v139 = vsub.s32 0, %v138
    %v140 = vrot.slane %v135, %v139
    %v142 = vadd.f32 %v123, %v140
    %v143 = vxor.u32 %v142, 2147483648
    %v144 = vmul.f32 %v143, 1.442695
    %v145 = vpow.pop %v144
    %v146 = vadd.f32 %v145, 1.0
    %v147 = vrcp.pop %v146
    %v148 = vmul.f32 1.0, %v147
    %149 = vrot.lane.b32.xlu0 %v140, 64
    %v150 = vpop.permute.xlu0 %149
    %v152 = vmul.f32 %v148, %v150
    %154 = vrot.lane.b32.xlu0 %v152, 64
    %v155 = vpop.permute.xlu0 %154
    %v157 = vadd.f32 %v123, %v155
    %v158 = vtanh.pop %v157
    %v159 = vsub.f32 1.0, %v148
    %161 = vrot.lane.b32.xlu0 %v158, 96
    %v162 = vpop.permute.xlu0 %161
    %v164 = vmul.f32 %v159, %v162
    %v165 = vmul.f32 %v148, 0.0
    %v166 = vadd.f32 %v164, %v165
    %168 = vrot.lane.b32.xlu0 %v166, 96
    %v169 = vpop.permute.xlu0 %168
    %vm170 = vcmask 261120
    %v171 = vsel %vm170, %v169, 0
    %173 = vmatprep.subr.mxu0 0.0
    %174 = vmatpush1.msra.mxu0 %v131
    %175 = vmatprep.subr.mxu0 0.0
    %176 = vmatpush1.msra.mxu0 %v132
    %177 = vmatprep.subr.mxu0 0.0
    %178 = vmatpush1.msra.mxu0 %v133
    %179 = vmatprep.subr.mxu0 0.0
    %180 = vmatpush1.msra.mxu0 %v134
    %181 = vmatprep.subr.mxu0 0.0
    %182 = vmatpush1.msra.mxu0 0.0
    %183 = vmatprep.subr.mxu0 0.0
    %184 = vmatpush1.msra.mxu0 0.0
    %185 = vmatprep.subr.mxu0 0.0
    %186 = vmatpush1.msra.mxu0 0.0
    %187 = vmatprep.subr.mxu0 0.0
    %188 = vmatpush1.msra.mxu0 0.0
    %189 = vmatprep.subr.mxu0 0.0
    %190 = vmatpush1.msra.mxu0 0.0
    %191 = vmatprep.subr.mxu0 0.0
    %192 = vmatpush1.msra.mxu0 0.0
    %193 = vmatprep.subr.mxu0 0.0
    %194 = vmatpush1.msra.mxu0 0.0
    %195 = vmatprep.subr.mxu0 0.0
    %196 = vmatpush1.msra.mxu0 0.0
    %197 = vmatprep.subr.mxu0 0.0
    %198 = vmatpush1.msra.mxu0 0.0
    %199 = vmatprep.subr.mxu0 0.0
    %200 = vmatpush1.msra.mxu0 0.0
    %201 = vmatprep.subr.mxu0 0.0
    %202 = vmatpush1.msra.mxu0 0.0
    %203 = vmatprep.subr.mxu0 0.0
    %204 = vmatpush1.msra.mxu0 0.0
    %205 = vmatprep.subr.mxu0 0.0
    %206 = vmatpush1.msra.mxu0 0.0
    %207 = vmatprep.subr.mxu0 0.0
    %208 = vmatpush1.msra.mxu0 0.0
    %209 = vmatprep.subr.mxu0 0.0
    %210 = vmatpush1.msra.mxu0 0.0
    %211 = vmatprep.subr.mxu0 0.0
    %212 = vmatpush1.msra.mxu0 0.0
    %213 = vmatprep.subr.mxu0 0.0
    %214 = vmatpush1.msra.mxu0 0.0
    %215 = vmatprep.subr.mxu0 0.0
    %216 = vmatpush1.msra.mxu0 0.0
    %217 = vmatprep.subr.mxu0 0.0
    %218 = vmatpush1.msra.mxu0 0.0
    %219 = vmatprep.subr.mxu0 0.0
    %220 = vmatpush1.msra.mxu0 0.0
    %221 = vmatprep.subr.mxu0 0.0
    %222 = vmatpush1.msra.mxu0 0.0
    %223 = vmatprep.subr.mxu0 0.0
    %224 = vmatpush1.msra.mxu0 0.0
    %225 = vmatprep.subr.mxu0 0.0
    %226 = vmatpush1.msra.mxu0 0.0
    %227 = vmatprep.subr.mxu0 0.0
    %228 = vmatpush1.msra.mxu0 0.0
    %229 = vmatprep.subr.mxu0 0.0
    %230 = vmatpush1.msra.mxu0 0.0
    %231 = vmatprep.subr.mxu0 0.0
    %232 = vmatpush1.msra.mxu0 0.0
    %233 = vmatprep.subr.mxu0 0.0
    %234 = vmatpush1.msra.mxu0 0.0
    %235 = vmatprep.subr.mxu0 0.0
    %236 = vmatpush1.msra.mxu0 0.0
    %237 = vmatprep.mubr.f32.mxu0 0.0
    %238 = vmatmul.mubr.f32.gmra.mrb[0].mxu0 %v171
    %v239 = vpop.f32.mrb[0].mxu0
    %v240 = vadd.f32 %v140, %v239
    %v241 = vpop.f32.mrb[0].mxu0
    %242 = vdwg.mxu0
    %v244 = vrot.slane %v240, 6
    %v246 = vadd.f32 %v123, %v244
    %v247 = vxor.u32 %v246, 2147483648
    %v248 = vmul.f32 %v247, 1.442695
    %v249 = vpow.pop %v248
    %v250 = vadd.f32 %v249, 1.0
    %v251 = vrcp.pop %v250
    %v252 = vmul.f32 1.0, %v251
    %253 = vrot.lane.b32.xlu0 %v244, 64
    %v254 = vpop.permute.xlu0 %253
    %v256 = vmul.f32 %v252, %v254
    %258 = vrot.lane.b32.xlu0 %v256, 64
    %v259 = vpop.permute.xlu0 %258
    %v261 = vadd.f32 %v123, %v259
    %v262 = vtanh.pop %v261
    %v263 = vsub.f32 1.0, %v252
    %265 = vrot.lane.b32.xlu0 %v262, 96
    %v266 = vpop.permute.xlu0 %265
    %v268 = vmul.f32 %v263, %v266
    %v269 = vrot.slane %v166, 6
    %v271 = vmul.f32 %v252, %v269
    %v272 = vadd.f32 %v268, %v271
    %v274 = vrot.slane %v272, 2
    %275 = vrot.lane.b32.xlu0 %v274, 96
    %v276 = vpop.permute.xlu0 %275
    %v277 = vsel %vm170, %v276, 0
    %279 = vmatprep.subr.mxu0 0.0
    %280 = vmatpush1.msra.mxu0 %v131
    %281 = vmatprep.subr.mxu0 0.0
    %282 = vmatpush1.msra.mxu0 %v132
    %283 = vmatprep.subr.mxu0 0.0
    %284 = vmatpush1.msra.mxu0 %v133
    %285 = vmatprep.subr.mxu0 0.0
    %286 = vmatpush1.msra.mxu0 %v134
    %287 = vmatprep.subr.mxu0 0.0
    %288 = vmatpush1.msra.mxu0 0.0
    %289 = vmatprep.subr.mxu0 0.0
    %290 = vmatpush1.msra.mxu0 0.0
    %291 = vmatprep.subr.mxu0 0.0
    %292 = vmatpush1.msra.mxu0 0.0
    %293 = vmatprep.subr.mxu0 0.0
    %294 = vmatpush1.msra.mxu0 0.0
    %295 = vmatprep.subr.mxu0 0.0
    %296 = vmatpush1.msra.mxu0 0.0
    %297 = vmatprep.subr.mxu0 0.0
    %298 = vmatpush1.msra.mxu0 0.0
    %299 = vmatprep.subr.mxu0 0.0
    %300 = vmatpush1.msra.mxu0 0.0
    %301 = vmatprep.subr.mxu0 0.0
    %302 = vmatpush1.msra.mxu0 0.0
    %303 = vmatprep.subr.mxu0 0.0
    %304 = vmatpush1.msra.mxu0 0.0
    %305 = vmatprep.subr.mxu0 0.0
    %306 = vmatpush1.msra.mxu0 0.0
    %307 = vmatprep.subr.mxu0 0.0
    %308 = vmatpush1.msra.mxu0 0.0
    %309 = vmatprep.subr.mxu0 0.0
    %310 = vmatpush1.msra.mxu0 0.0
    %311 = vmatprep.subr.mxu0 0.0
    %312 = vmatpush1.msra.mxu0 0.0
    %313 = vmatprep.subr.mxu0 0.0
    %314 = vmatpush1.msra.mxu0 0.0
    %315 = vmatprep.subr.mxu0 0.0
    %316 = vmatpush1.msra.mxu0 0.0
    %317 = vmatprep.subr.mxu0 0.0
    %318 = vmatpush1.msra.mxu0 0.0
    %319 = vmatprep.subr.mxu0 0.0
    %320 = vmatpush1.msra.mxu0 0.0
    %321 = vmatprep.subr.mxu0 0.0
    %322 = vmatpush1.msra.mxu0 0.0
    %323 = vmatprep.subr.mxu0 0.0
    %324 = vmatpush1.msra.mxu0 0.0
    %325 = vmatprep.subr.mxu0 0.0
    %326 = vmatpush1.msra.mxu0 0.0
    %327 = vmatprep.subr.mxu0 0.0
    %328 = vmatpush1.msra.mxu0 0.0
    %329 = vmatprep.subr.mxu0 0.0
    %330 = vmatpush1.msra.mxu0 0.0
    %331 = vmatprep.subr.mxu0 0.0
    %332 = vmatpush1.msra.mxu0 0.0
    %333 = vmatprep.subr.mxu0 0.0
    %334 = vmatpush1.msra.mxu0 0.0
    %335 = vmatprep.subr.mxu0 0.0
    %336 = vmatpush1.msra.mxu0 0.0
    %337 = vmatprep.subr.mxu0 0.0
    %338 = vmatpush1.msra.mxu0 0.0
    %339 = vmatprep.subr.mxu0 0.0
    %340 = vmatpush1.msra.mxu0 0.0
    %341 = vmatprep.subr.mxu0 0.0
    %342 = vmatpush1.msra.mxu0 0.0
    %343 = vmatprep.mubr.f32.mxu0 0.0
    %344 = vmatmul.mubr.f32.gmra.mrb[0].mxu0 %v277
    %v345 = vpop.f32.mrb[0].mxu0
    %v346 = vadd.f32 %v140, %v345
    %v347 = vpop.f32.mrb[0].mxu0
    %348 = vdwg.mxu0
    %v350 = vrot.slane %v346, 4
    %v352 = vadd.f32 %v123, %v350
    %v353 = vxor.u32 %v352, 2147483648
    %v354 = vmul.f32 %v353, 1.442695
    %v355 = vpow.pop %v354
    %v356 = vadd.f32 %v355, 1.0
    %v357 = vrcp.pop %v356
    %v358 = vmul.f32 1.0, %v357
    %359 = vrot.lane.b32.xlu0 %v350, 64
    %v360 = vpop.permute.xlu0 %359
    %v362 = vmul.f32 %v358, %v360
    %364 = vrot.lane.b32.xlu0 %v362, 64
    %v365 = vpop.permute.xlu0 %364
    %v367 = vadd.f32 %v123, %v365
    %v368 = vtanh.pop %v367
    %v369 = vsub.f32 1.0, %v358
    %371 = vrot.lane.b32.xlu0 %v368, 96
    %v372 = vpop.permute.xlu0 %371
    %v374 = vmul.f32 %v369, %v372
    %v375 = vrot.slane %v272, 6
    %v377 = vmul.f32 %v358, %v375
    %v378 = vadd.f32 %v374, %v377
    %v380 = vrot.slane %v378, 4
    %381 = vrot.lane.b32.xlu0 %v380, 96
    %v382 = vpop.permute.xlu0 %381
    %v383 = vsel %vm170, %v382, 0
    %385 = vmatprep.subr.mxu0 0.0
    %386 = vmatpush1.msra.mxu0 %v131
    %387 = vmatprep.subr.mxu0 0.0
    %388 = vmatpush1.msra.mxu0 %v132
    %389 = vmatprep.subr.mxu0 0.0
    %390 = vmatpush1.msra.mxu0 %v133
    %391 = vmatprep.subr.mxu0 0.0
    %392 = vmatpush1.msra.mxu0 %v134
    %393 = vmatprep.subr.mxu0 0.0
    %394 = vmatpush1.msra.mxu0 0.0
    %395 = vmatprep.subr.mxu0 0.0
    %396 = vmatpush1.msra.mxu0 0.0
    %397 = vmatprep.subr.mxu0 0.0
    %398 = vmatpush1.msra.mxu0 0.0
    %399 = vmatprep.subr.mxu0 0.0
    %400 = vmatpush1.msra.mxu0 0.0
    %401 = vmatprep.subr.mxu0 0.0
    %402 = vmatpush1.msra.mxu0 0.0
    %403 = vmatprep.subr.mxu0 0.0
    %404 = vmatpush1.msra.mxu0 0.0
    %405 = vmatprep.subr.mxu0 0.0
    %406 = vmatpush1.msra.mxu0 0.0
    %407 = vmatprep.subr.mxu0 0.0
    %408 = vmatpush1.msra.mxu0 0.0
    %409 = vmatprep.subr.mxu0 0.0
    %410 = vmatpush1.msra.mxu0 0.0
    %411 = vmatprep.subr.mxu0 0.0
    %412 = vmatpush1.msra.mxu0 0.0
    %413 = vmatprep.subr.mxu0 0.0
    %414 = vmatpush1.msra.mxu0 0.0
    %415 = vmatprep.subr.mxu0 0.0
    %416 = vmatpush1.msra.mxu0 0.0
    %417 = vmatprep.subr.mxu0 0.0
    %418 = vmatpush1.msra.mxu0 0.0
    %419 = vmatprep.subr.mxu0 0.0
    %420 = vmatpush1.msra.mxu0 0.0
    %421 = vmatprep.subr.mxu0 0.0
    %422 = vmatpush1.msra.mxu0 0.0
    %423 = vmatprep.subr.mxu0 0.0
    %424 = vmatpush1.msra.mxu0 0.0
    %425 = vmatprep.subr.mxu0 0.0
    %426 = vmatpush1.msra.mxu0 0.0
    %427 = vmatprep.subr.mxu0 0.0
    %428 = vmatpush1.msra.mxu0 0.0
    %429 = vmatprep.subr.mxu0 0.0
    %430 = vmatpush1.msra.mxu0 0.0
    %431 = vmatprep.subr.mxu0 0.0
    %432 = vmatpush1.msra.mxu0 0.0
    %433 = vmatprep.subr.mxu0 0.0
    %434 = vmatpush1.msra.mxu0 0.0
    %435 = vmatprep.subr.mxu0 0.0
    %436 = vmatpush1.msra.mxu0 0.0
    %437 = vmatprep.subr.mxu0 0.0
    %438 = vmatpush1.msra.mxu0 0.0
    %439 = vmatprep.subr.mxu0 0.0
    %440 = vmatpush1.msra.mxu0 0.0
    %441 = vmatprep.subr.mxu0 0.0
    %442 = vmatpush1.msra.mxu0 0.0
    %443 = vmatprep.subr.mxu0 0.0
    %444 = vmatpush1.msra.mxu0 0.0
    %445 = vmatprep.subr.mxu0 0.0
    %446 = vmatpush1.msra.mxu0 0.0
    %447 = vmatprep.subr.mxu0 0.0
    %448 = vmatpush1.msra.mxu0 0.0
    %449 = vmatprep.mubr.f32.mxu0 0.0
    %450 = vmatmul.mubr.f32.gmra.mrb[0].mxu0 %v383
    %v451 = vpop.f32.mrb[0].mxu0
    %v452 = vadd.f32 %v140, %v451
    %v453 = vpop.f32.mrb[0].mxu0
    %454 = vdwg.mxu0
    %v456 = vrot.slane %v452, 2
    %v458 = vadd.f32 %v123, %v456
    %v459 = vxor.u32 %v458, 2147483648
    %v460 = vmul.f32 %v459, 1.442695
    %v461 = vpow.pop %v460
    %v462 = vadd.f32 %v461, 1.0
    %v463 = vrcp.pop %v462
    %v464 = vmul.f32 1.0, %v463
    %465 = vrot.lane.b32.xlu0 %v456, 64
    %v466 = vpop.permute.xlu0 %465
    %v468 = vmul.f32 %v464, %v466
    %470 = vrot.lane.b32.xlu0 %v468, 64
    %v471 = vpop.permute.xlu0 %470
    %v473 = vadd.f32 %v123, %v471
    %v474 = vtanh.pop %v473
    %v475 = vsub.f32 1.0, %v464
    %477 = vrot.lane.b32.xlu0 %v474, 96
    %v478 = vpop.permute.xlu0 %477
    %v480 = vmul.f32 %v475, %v478
    %v481 = vrot.slane %v378, 6
    %v483 = vmul.f32 %v464, %v481
    %v484 = vadd.f32 %v480, %v483
    %v486 = vrot.slane %v484, 6
    %487 = vrot.lane.b32.xlu0 %v486, 96
    %v488 = vpop.permute.xlu0 %487
    %v489 = vsel %vm170, %v488, 0
    %491 = vmatprep.subr.mxu0 0.0
    %492 = vmatpush1.msra.mxu0 %v131
    %493 = vmatprep.subr.mxu0 0.0
    %494 = vmatpush1.msra.mxu0 %v132
    %495 = vmatprep.subr.mxu0 0.0
    %496 = vmatpush1.msra.mxu0 %v133
    %497 = vmatprep.subr.mxu0 0.0
    %498 = vmatpush1.msra.mxu0 %v134
    %499 = vmatprep.subr.mxu0 0.0
    %500 = vmatpush1.msra.mxu0 0.0
    %501 = vmatprep.subr.mxu0 0.0
    %502 = vmatpush1.msra.mxu0 0.0
    %503 = vmatprep.subr.mxu0 0.0
    %504 = vmatpush1.msra.mxu0 0.0
    %505 = vmatprep.subr.mxu0 0.0
    %506 = vmatpush1.msra.mxu0 0.0
    %507 = vmatprep.subr.mxu0 0.0
    %508 = vmatpush1.msra.mxu0 0.0
    %509 = vmatprep.subr.mxu0 0.0
    %510 = vmatpush1.msra.mxu0 0.0
    %511 = vmatprep.subr.mxu0 0.0
    %512 = vmatpush1.msra.mxu0 0.0
    %513 = vmatprep.subr.mxu0 0.0
    %514 = vmatpush1.msra.mxu0 0.0
    %515 = vmatprep.subr.mxu0 0.0
    %516 = vmatpush1.msra.mxu0 0.0
    %517 = vmatprep.subr.mxu0 0.0
    %518 = vmatpush1.msra.mxu0 0.0
    %519 = vmatprep.subr.mxu0 0.0
    %520 = vmatpush1.msra.mxu0 0.0
    %521 = vmatprep.subr.mxu0 0.0
    %522 = vmatpush1.msra.mxu0 0.0
    %523 = vmatprep.subr.mxu0 0.0
    %524 = vmatpush1.msra.mxu0 0.0
    %525 = vmatprep.subr.mxu0 0.0
    %526 = vmatpush1.msra.mxu0 0.0
    %527 = vmatprep.subr.mxu0 0.0
    %528 = vmatpush1.msra.mxu0 0.0
    %529 = vmatprep.subr.mxu0 0.0
    %530 = vmatpush1.msra.mxu0 0.0
    %531 = vmatprep.subr.mxu0 0.0
    %532 = vmatpush1.msra.mxu0 0.0
    %533 = vmatprep.subr.mxu0 0.0
    %534 = vmatpush1.msra.mxu0 0.0
    %535 = vmatprep.subr.mxu0 0.0
    %536 = vmatpush1.msra.mxu0 0.0
    %537 = vmatprep.subr.mxu0 0.0
    %538 = vmatpush1.msra.mxu0 0.0
    %539 = vmatprep.subr.mxu0 0.0
    %540 = vmatpush1.msra.mxu0 0.0
    %541 = vmatprep.subr.mxu0 0.0
    %542 = vmatpush1.msra.mxu0 0.0
    %543 = vmatprep.subr.mxu0 0.0
    %544 = vmatpush1.msra.mxu0 0.0
    %545 = vmatprep.subr.mxu0 0.0
    %546 = vmatpush1.msra.mxu0 0.0
    %547 = vmatprep.subr.mxu0 0.0
    %548 = vmatpush1.msra.mxu0 0.0
    %549 = vmatprep.subr.mxu0 0.0
    %550 = vmatpush1.msra.mxu0 0.0
    %551 = vmatprep.subr.mxu0 0.0
    %552 = vmatpush1.msra.mxu0 0.0
    %553 = vmatprep.subr.mxu0 0.0
    %554 = vmatpush1.msra.mxu0 0.0
    %555 = vmatprep.mubr.f32.mxu0 0.0
    %556 = vmatmul.mubr.f32.gmra.mrb[0].mxu0 %v489
    %v557 = vpop.f32.mrb[0].mxu0
    %v558 = vadd.f32 %v140, %v557
    %v559 = vpop.f32.mrb[0].mxu0
    %560 = vdwg.mxu0
    %v561 = vadd.f32 %v128, %v558
    %v562 = vxor.u32 %v561, 2147483648
    %v563 = vmul.f32 %v562, 1.442695
    %v564 = vpow.pop %v563
    %v565 = vadd.f32 %v564, 1.0
    %v566 = vrcp.pop %v565
    %v567 = vmul.f32 1.0, %v566
    %569 = vrot.lane.b32.xlu0 %v558, 64
    %v570 = vpop.permute.xlu0 %569
    %v572 = vmul.f32 %v567, %v570
    %574 = vrot.lane.b32.xlu0 %v572, 64
    %v575 = vpop.permute.xlu0 %574
    %v577 = vadd.f32 %v128, %v575
    %v578 = vtanh.pop %v577
    %v579 = vsub.f32 1.0, %v567
    %581 = vrot.lane.b32.xlu0 %v578, 96
    %v582 = vpop.permute.xlu0 %581
    %v584 = vmul.f32 %v579, %v582
    %v586 = vmul.f32 %v567, %v486
    %v587 = vadd.f32 %v584, %v586
    %589 = vrot.lane.b32.xlu0 %v587, 96
    %v590 = vpop.permute.xlu0 %589
    %v591 = vsel %vm170, %v590, 0
    %593 = vmatprep.subr.mxu0 0.0
    %594 = vmatpush1.msra.mxu0 %v131
    %595 = vmatprep.subr.mxu0 0.0
    %596 = vmatpush1.msra.mxu0 %v132
    %597 = vmatprep.subr.mxu0 0.0
    %598 = vmatpush1.msra.mxu0 %v133
    %599 = vmatprep.subr.mxu0 0.0
    %600 = vmatpush1.msra.mxu0 %v134
    %601 = vmatprep.subr.mxu0 0.0
    %602 = vmatpush1.msra.mxu0 0.0
    %603 = vmatprep.subr.mxu0 0.0
    %604 = vmatpush1.msra.mxu0 0.0
    %605 = vmatprep.subr.mxu0 0.0
    %606 = vmatpush1.msra.mxu0 0.0
    %607 = vmatprep.subr.mxu0 0.0
    %608 = vmatpush1.msra.mxu0 0.0
    %609 = vmatprep.subr.mxu0 0.0
    %610 = vmatpush1.msra.mxu0 0.0
    %611 = vmatprep.subr.mxu0 0.0
    %612 = vmatpush1.msra.mxu0 0.0
    %613 = vmatprep.subr.mxu0 0.0
    %614 = vmatpush1.msra.mxu0 0.0
    %615 = vmatprep.subr.mxu0 0.0
    %616 = vmatpush1.msra.mxu0 0.0
    %617 = vmatprep.subr.mxu0 0.0
    %618 = vmatpush1.msra.mxu0 0.0
    %619 = vmatprep.subr.mxu0 0.0
    %620 = vmatpush1.msra.mxu0 0.0
    %621 = vmatprep.subr.mxu0 0.0
    %622 = vmatpush1.msra.mxu0 0.0
    %623 = vmatprep.subr.mxu0 0.0
    %624 = vmatpush1.msra.mxu0 0.0
    %625 = vmatprep.subr.mxu0 0.0
    %626 = vmatpush1.msra.mxu0 0.0
    %627 = vmatprep.subr.mxu0 0.0
    %628 = vmatpush1.msra.mxu0 0.0
    %629 = vmatprep.subr.mxu0 0.0
    %630 = vmatpush1.msra.mxu0 0.0
    %631 = vmatprep.subr.mxu0 0.0
    %632 = vmatpush1.msra.mxu0 0.0
    %633 = vmatprep.subr.mxu0 0.0
    %634 = vmatpush1.msra.mxu0 0.0
    %635 = vmatprep.subr.mxu0 0.0
    %636 = vmatpush1.msra.mxu0 0.0
    %637 = vmatprep.subr.mxu0 0.0
    %638 = vmatpush1.msra.mxu0 0.0
    %639 = vmatprep.subr.mxu0 0.0
    %640 = vmatpush1.msra.mxu0 0.0
    %641 = vmatprep.subr.mxu0 0.0
    %642 = vmatpush1.msra.mxu0 0.0
    %643 = vmatprep.subr.mxu0 0.0
    %644 = vmatpush1.msra.mxu0 0.0
    %645 = vmatprep.subr.mxu0 0.0
    %646 = vmatpush1.msra.mxu0 0.0
    %647 = vmatprep.subr.mxu0 0.0
    %648 = vmatpush1.msra.mxu0 0.0
    %649 = vmatprep.subr.mxu0 0.0
    %650 = vmatpush1.msra.mxu0 0.0
    %651 = vmatprep.subr.mxu0 0.0
    %652 = vmatpush1.msra.mxu0 0.0
    %653 = vmatprep.subr.mxu0 0.0
    %654 = vmatpush1.msra.mxu0 0.0
    %655 = vmatprep.subr.mxu0 0.0
    %656 = vmatpush1.msra.mxu0 0.0
    %657 = vmatprep.mubr.f32.mxu0 0.0
    %658 = vmatmul.mubr.f32.gmra.mrb[0].mxu0 %v591
    %v659 = vpop.f32.mrb[0].mxu0
    %v660 = vadd.f32 %v140, %v659
    %v661 = vpop.f32.mrb[0].mxu0
    %662 = vdwg.mxu0
    %v664 = vrot.slane %v660, 6
    %v666 = vadd.f32 %v128, %v664
    %v667 = vxor.u32 %v666, 2147483648
    %v668 = vmul.f32 %v667, 1.442695
    %v669 = vpow.pop %v668
    %v670 = vadd.f32 %v669, 1.0
    %v671 = vrcp.pop %v670
    %v672 = vmul.f32 1.0, %v671
    %673 = vrot.lane.b32.xlu0 %v664, 64
    %v674 = vpop.permute.xlu0 %673
    %v676 = vmul.f32 %v672, %v674
    %678 = vrot.lane.b32.xlu0 %v676, 64
    %v679 = vpop.permute.xlu0 %678
    %v681 = vadd.f32 %v128, %v679
    %v682 = vtanh.pop %v681
    %v683 = vsub.f32 1.0, %v672
    %685 = vrot.lane.b32.xlu0 %v682, 96
    %v686 = vpop.permute.xlu0 %685
    %v688 = vmul.f32 %v683, %v686
    %v689 = vrot.slane %v587, 6
    %v691 = vmul.f32 %v672, %v689
    %v692 = vadd.f32 %v688, %v691
    %v694 = vrot.slane %v692, 2
    %695 = vrot.lane.b32.xlu0 %v694, 96
    %v696 = vpop.permute.xlu0 %695
    %v697 = vsel %vm170, %v696, 0
    %699 = vmatprep.subr.mxu0 0.0
    %700 = vmatpush1.msra.mxu0 %v131
    %701 = vmatprep.subr.mxu0 0.0
    %702 = vmatpush1.msra.mxu0 %v132
    %703 = vmatprep.subr.mxu0 0.0
    %704 = vmatpush1.msra.mxu0 %v133
    %705 = vmatprep.subr.mxu0 0.0
    %706 = vmatpush1.msra.mxu0 %v134
    %707 = vmatprep.subr.mxu0 0.0
    %708 = vmatpush1.msra.mxu0 0.0
    %709 = vmatprep.subr.mxu0 0.0
    %710 = vmatpush1.msra.mxu0 0.0
    %711 = vmatprep.subr.mxu0 0.0
    %712 = vmatpush1.msra.mxu0 0.0
    %713 = vmatprep.subr.mxu0 0.0
    %714 = vmatpush1.msra.mxu0 0.0
    %715 = vmatprep.subr.mxu0 0.0
    %716 = vmatpush1.msra.mxu0 0.0
    %717 = vmatprep.subr.mxu0 0.0
    %718 = vmatpush1.msra.mxu0 0.0
    %719 = vmatprep.subr.mxu0 0.0
    %720 = vmatpush1.msra.mxu0 0.0
    %721 = vmatprep.subr.mxu0 0.0
    %722 = vmatpush1.msra.mxu0 0.0
    %723 = vmatprep.subr.mxu0 0.0
    %724 = vmatpush1.msra.mxu0 0.0
    %725 = vmatprep.subr.mxu0 0.0
    %726 = vmatpush1.msra.mxu0 0.0
    %727 = vmatprep.subr.mxu0 0.0
    %728 = vmatpush1.msra.mxu0 0.0
    %729 = vmatprep.subr.mxu0 0.0
    %730 = vmatpush1.msra.mxu0 0.0
    %731 = vmatprep.subr.mxu0 0.0
    %732 = vmatpush1.msra.mxu0 0.0
    %733 = vmatprep.subr.mxu0 0.0
    %734 = vmatpush1.msra.mxu0 0.0
    %735 = vmatprep.subr.mxu0 0.0
    %736 = vmatpush1.msra.mxu0 0.0
    %737 = vmatprep.subr.mxu0 0.0
    %738 = vmatpush1.msra.mxu0 0.0
    %739 = vmatprep.subr.mxu0 0.0
    %740 = vmatpush1.msra.mxu0 0.0
    %741 = vmatprep.subr.mxu0 0.0
    %742 = vmatpush1.msra.mxu0 0.0
    %743 = vmatprep.subr.mxu0 0.0
    %744 = vmatpush1.msra.mxu0 0.0
    %745 = vmatprep.subr.mxu0 0.0
    %746 = vmatpush1.msra.mxu0 0.0
    %747 = vmatprep.subr.mxu0 0.0
    %748 = vmatpush1.msra.mxu0 0.0
    %749 = vmatprep.subr.mxu0 0.0
    %750 = vmatpush1.msra.mxu0 0.0
    %751 = vmatprep.subr.mxu0 0.0
    %752 = vmatpush1.msra.mxu0 0.0
    %753 = vmatprep.subr.mxu0 0.0
    %754 = vmatpush1.msra.mxu0 0.0
    %755 = vmatprep.subr.mxu0 0.0
    %756 = vmatpush1.msra.mxu0 0.0
    %757 = vmatprep.subr.mxu0 0.0
    %758 = vmatpush1.msra.mxu0 0.0
    %759 = vmatprep.subr.mxu0 0.0
    %760 = vmatpush1.msra.mxu0 0.0
    %761 = vmatprep.subr.mxu0 0.0
    %762 = vmatpush1.msra.mxu0 0.0
    %763 = vmatprep.mubr.f32.mxu0 0.0
    %764 = vmatmul.mubr.f32.gmra.mrb[0].mxu0 %v697
    %v765 = vpop.f32.mrb[0].mxu0
    %v766 = vadd.f32 %v140, %v765
    %v767 = vpop.f32.mrb[0].mxu0
    %768 = vdwg.mxu0
    %v770 = vrot.slane %v766, 4
    %v772 = vadd.f32 %v128, %v770
    %v773 = vxor.u32 %v772, 2147483648
    %v774 = vmul.f32 %v773, 1.442695
    %v775 = vpow.pop %v774
    %v776 = vadd.f32 %v775, 1.0
    %v777 = vrcp.pop %v776
    %v778 = vmul.f32 1.0, %v777
    %779 = vrot.lane.b32.xlu0 %v770, 64
    %v780 = vpop.permute.xlu0 %779
    %v782 = vmul.f32 %v778, %v780
    %784 = vrot.lane.b32.xlu0 %v782, 64
    %v785 = vpop.permute.xlu0 %784
    %v787 = vadd.f32 %v128, %v785
    %v788 = vtanh.pop %v787
    %v789 = vsub.f32 1.0, %v778
    %791 = vrot.lane.b32.xlu0 %v788, 96
    %v792 = vpop.permute.xlu0 %791
    %v794 = vmul.f32 %v789, %v792
    %v795 = vrot.slane %v692, 6
    %v797 = vmul.f32 %v778, %v795
    %v798 = vadd.f32 %v794, %v797
    %v800 = vrot.slane %v798, 4
    %801 = vrot.lane.b32.xlu0 %v800, 96
    %v802 = vpop.permute.xlu0 %801
    %v803 = vsel %vm170, %v802, 0
    %805 = vmatprep.subr.mxu0 0.0
    %806 = vmatpush1.msra.mxu0 %v131
    %807 = vmatprep.subr.mxu0 0.0
    %808 = vmatpush1.msra.mxu0 %v132
    %809 = vmatprep.subr.mxu0 0.0
    %810 = vmatpush1.msra.mxu0 %v133
    %811 = vmatprep.subr.mxu0 0.0
    %812 = vmatpush1.msra.mxu0 %v134
    %813 = vmatprep.subr.mxu0 0.0
    %814 = vmatpush1.msra.mxu0 0.0
    %815 = vmatprep.subr.mxu0 0.0
    %816 = vmatpush1.msra.mxu0 0.0
    %817 = vmatprep.subr.mxu0 0.0
    %818 = vmatpush1.msra.mxu0 0.0
    %819 = vmatprep.subr.mxu0 0.0
    %820 = vmatpush1.msra.mxu0 0.0
    %821 = vmatprep.subr.mxu0 0.0
    %822 = vmatpush1.msra.mxu0 0.0
    %823 = vmatprep.subr.mxu0 0.0
    %824 = vmatpush1.msra.mxu0 0.0
    %825 = vmatprep.subr.mxu0 0.0
    %826 = vmatpush1.msra.mxu0 0.0
    %827 = vmatprep.subr.mxu0 0.0
    %828 = vmatpush1.msra.mxu0 0.0
    %829 = vmatprep.subr.mxu0 0.0
    %830 = vmatpush1.msra.mxu0 0.0
    %831 = vmatprep.subr.mxu0 0.0
    %832 = vmatpush1.msra.mxu0 0.0
    %833 = vmatprep.subr.mxu0 0.0
    %834 = vmatpush1.msra.mxu0 0.0
    %835 = vmatprep.subr.mxu0 0.0
    %836 = vmatpush1.msra.mxu0 0.0
    %837 = vmatprep.subr.mxu0 0.0
    %838 = vmatpush1.msra.mxu0 0.0
    %839 = vmatprep.subr.mxu0 0.0
    %840 = vmatpush1.msra.mxu0 0.0
    %841 = vmatprep.subr.mxu0 0.0
    %842 = vmatpush1.msra.mxu0 0.0
    %843 = vmatprep.subr.mxu0 0.0
    %844 = vmatpush1.msra.mxu0 0.0
    %845 = vmatprep.subr.mxu0 0.0
    %846 = vmatpush1.msra.mxu0 0.0
    %847 = vmatprep.subr.mxu0 0.0
    %848 = vmatpush1.msra.mxu0 0.0
    %849 = vmatprep.subr.mxu0 0.0
    %850 = vmatpush1.msra.mxu0 0.0
    %851 = vmatprep.subr.mxu0 0.0
    %852 = vmatpush1.msra.mxu0 0.0
    %853 = vmatprep.subr.mxu0 0.0
    %854 = vmatpush1.msra.mxu0 0.0
    %855 = vmatprep.subr.mxu0 0.0
    %856 = vmatpush1.msra.mxu0 0.0
    %857 = vmatprep.subr.mxu0 0.0
    %858 = vmatpush1.msra.mxu0 0.0
    %859 = vmatprep.subr.mxu0 0.0
    %860 = vmatpush1.msra.mxu0 0.0
    %861 = vmatprep.subr.mxu0 0.0
    %862 = vmatpush1.msra.mxu0 0.0
    %863 = vmatprep.subr.mxu0 0.0
    %864 = vmatpush1.msra.mxu0 0.0
    %865 = vmatprep.subr.mxu0 0.0
    %866 = vmatpush1.msra.mxu0 0.0
    %867 = vmatprep.subr.mxu0 0.0
    %868 = vmatpush1.msra.mxu0 0.0
    %869 = vmatprep.mubr.f32.mxu0 0.0
    %870 = vmatmul.mubr.f32.gmra.mrb[0].mxu0 %v803
    %v871 = vpop.f32.mrb[0].mxu0
    %v872 = vadd.f32 %v140, %v871
    %v873 = vpop.f32.mrb[0].mxu0
    %874 = vdwg.mxu0
    %v876 = vrot.slane %v872, 2
    %v878 = vadd.f32 %v128, %v876
    %v879 = vxor.u32 %v878, 2147483648
    %v880 = vmul.f32 %v879, 1.442695
    %v881 = vpow.pop %v880
    %v882 = vadd.f32 %v881, 1.0
    %v883 = vrcp.pop %v882
    %v884 = vmul.f32 1.0, %v883
    %885 = vrot.lane.b32.xlu0 %v876, 64
    %v886 = vpop.permute.xlu0 %885
    %v888 = vmul.f32 %v884, %v886
    %890 = vrot.lane.b32.xlu0 %v888, 64
    %v891 = vpop.permute.xlu0 %890
    %v893 = vadd.f32 %v128, %v891
    %v894 = vtanh.pop %v893
    %v895 = vsub.f32 1.0, %v884
    %897 = vrot.lane.b32.xlu0 %v894, 96
    %v898 = vpop.permute.xlu0 %897
    %v900 = vmul.f32 %v895, %v898
    %v901 = vrot.slane %v798, 6
    %v903 = vmul.f32 %v884, %v901
    %v904 = vadd.f32 %v900, %v903
    %v905 = vld [vmem:[%s5] sm:$0xff]
    %v906 = vld [vmem:[%s5 + $0x8] sm:$0xff]
    %v907 = vld [vmem:[%s5 + $0x10] sm:$0xff]
    %v908 = vld [vmem:[%s5 + $0x18] sm:$0xff]
    %v909 = vld [vmem:[%s5 + $0x20] sm:$0xff]
    %v910 = vld [vmem:[%s5 + $0x28] sm:$0xff]
    %v911 = vld [vmem:[%s5 + $0x30] sm:$0xff]
    %v912 = vld [vmem:[%s5 + $0x38] sm:$0xff]
    %v913 = vld [vmem:[%s6] sm:$0x1]
    %v914 = vld [vmem:[%s7] sm:$0x1]
    %v916 = vlaneseq
    %v917 = vshrl.u32 %v916, 7
    %v918 = vsub.s32 0, %v917
    %v919 = vrot.slane %v914, %v918
    %v921 = vld [vmem:[%s8] sm:$0x1]
    %v923 = vlaneseq
    %v924 = vshrl.u32 %v923, 7
    %v925 = vsub.s32 0, %v924
    %v926 = vrot.slane %v921, %v925
    %v928 = vrot.slane %v904, 6
    %929 = vrot.lane.b32.xlu0 %v928, 96
    %v930 = vpop.permute.xlu0 %929
    %v931 = vsel %vm170, %v930, 0
    %933 = vmatprep.subr.mxu0 %v906
    %934 = vmatpush1.msra.mxu0 %v905
    %935 = vmatprep.subr.mxu0 %v908
    %936 = vmatpush1.msra.mxu0 %v907
    %937 = vmatprep.subr.mxu0 %v910
    %938 = vmatpush1.msra.mxu0 %v909
    %939 = vmatprep.subr.mxu0 %v912
    %940 = vmatpush1.msra.mxu0 %v911
    %941 = vmatprep.subr.mxu0 0.0
    %942 = vmatpush1.msra.mxu0 0.0
    %943 = vmatprep.subr.mxu0 0.0
    %944 = vmatpush1.msra.mxu0 0.0
    %945 = vmatprep.subr.mxu0 0.0
    %946 = vmatpush1.msra.mxu0 0.0
    %947 = vmatprep.subr.mxu0 0.0
    %948 = vmatpush1.msra.mxu0 0.0
    %949 = vmatprep.subr.mxu0 0.0
    %950 = vmatpush1.msra.mxu0 0.0
    %951 = vmatprep.subr.mxu0 0.0
    %952 = vmatpush1.msra.mxu0 0.0
    %953 = vmatprep.subr.mxu0 0.0
    %954 = vmatpush1.msra.mxu0 0.0
    %955 = vmatprep.subr.mxu0 0.0
    %956 = vmatpush1.msra.mxu0 0.0
    %957 = vmatprep.subr.mxu0 0.0
    %958 = vmatpush1.msra.mxu0 0.0
    %959 = vmatprep.subr.mxu0 0.0
    %960 = vmatpush1.msra.mxu0 0.0
    %961 = vmatprep.subr.mxu0 0.0
    %962 = vmatpush1.msra.mxu0 0.0
    %963 = vmatprep.subr.mxu0 0.0
    %964 = vmatpush1.msra.mxu0 0.0
    %965 = vmatprep.subr.mxu0 0.0
    %966 = vmatpush1.msra.mxu0 0.0
    %967 = vmatprep.subr.mxu0 0.0
    %968 = vmatpush1.msra.mxu0 0.0
    %969 = vmatprep.subr.mxu0 0.0
    %970 = vmatpush1.msra.mxu0 0.0
    %971 = vmatprep.subr.mxu0 0.0
    %972 = vmatpush1.msra.mxu0 0.0
    %973 = vmatprep.subr.mxu0 0.0
    %974 = vmatpush1.msra.mxu0 0.0
    %975 = vmatprep.subr.mxu0 0.0
    %976 = vmatpush1.msra.mxu0 0.0
    %977 = vmatprep.subr.mxu0 0.0
    %978 = vmatpush1.msra.mxu0 0.0
    %979 = vmatprep.subr.mxu0 0.0
    %980 = vmatpush1.msra.mxu0 0.0
    %981 = vmatprep.subr.mxu0 0.0
    %982 = vmatpush1.msra.mxu0 0.0
    %983 = vmatprep.subr.mxu0 0.0
    %984 = vmatpush1.msra.mxu0 0.0
    %985 = vmatprep.subr.mxu0 0.0
    %986 = vmatpush1.msra.mxu0 0.0
    %987 = vmatprep.subr.mxu0 0.0
    %988 = vmatpush1.msra.mxu0 0.0
    %989 = vmatprep.subr.mxu0 0.0
    %990 = vmatpush1.msra.mxu0 0.0
    %991 = vmatprep.subr.mxu0 0.0
    %992 = vmatpush1.msra.mxu0 0.0
    %993 = vmatprep.subr.mxu0 0.0
    %994 = vmatpush1.msra.mxu0 0.0
    %995 = vmatprep.subr.mxu0 0.0
    %996 = vmatpush1.msra.mxu0 0.0
    %997 = vmatprep.mubr.f32.mxu0 0.0
    %998 = vmatmul.mubr.f32.gmra.mrb[0].mxu0 %v931
    %v999 = vpop.f32.mrb[0].mxu0
    %v1000 = vadd.f32 0.0, %v999
    %v1001 = vpop.f32.mrb[0].mxu0
    %v1002 = vadd.f32 0.0, %v1001
    %1003 = vdwg.mxu0
    %1004 = vrot.lane.b32.xlu0 %v926, 96
    %v1005 = vpop.permute.xlu0 %1004
    %v1007 = vadd.f32 %v1000, %v1005
    %v1008 = vadd.f32 %v1002, %v1005
    %v1010 = vlaneseq
    %v1011 = vshrl.u32 %v1010, 7
    %v1012 = vsub.s32 0, %v1011
    %v1013 = vrot.slane %v913, %v1012
    %1016 = vrot.lane.b32.xlu0 %v1007, 32
    %v1017 = vpop.permute.xlu0 %1016
    %v1019 = vadd.f32 %v1013, %v1017
    %v1020 = vxor.u32 %v1019, 2147483648
    %v1021 = vmul.f32 %v1020, 1.442695
    %v1022 = vpow.pop %v1021
    %v1023 = vadd.f32 %v1022, 1.0
    %v1024 = vrcp.pop %v1023
    %v1025 = vmul.f32 1.0, %v1024
    %1027 = vrot.lane.b32.xlu0 %v1008, 32
    %v1028 = vpop.permute.xlu0 %1027
    %v1030 = vadd.f32 %v1013, %v1028
    %v1031 = vxor.u32 %v1030, 2147483648
    %v1032 = vmul.f32 %v1031, 1.442695
    %v1033 = vpow.pop %v1032
    %v1034 = vadd.f32 %v1033, 1.0
    %v1035 = vrcp.pop %v1034
    %v1036 = vmul.f32 1.0, %v1035
    %1037 = vrot.lane.b32.xlu0 %v1008, 96
    %v1038 = vpop.permute.xlu0 %1037
    %v1040 = vmul.f32 %v1025, %v1038
    %1042 = vrot.lane.b32.xlu0 %v1040, 64
    %v1043 = vpop.permute.xlu0 %1042
    %v1045 = vadd.f32 %v1013, %v1043
    %v1046 = vtanh.pop %v1045
    %v1047 = vsub.f32 1.0, %v1036
    %1049 = vrot.lane.b32.xlu0 %v1046, 96
    %v1050 = vpop.permute.xlu0 %1049
    %v1052 = vmul.f32 %v1047, %v1050
    %v1054 = vmul.f32 %v1036, %v928
    %v1055 = vadd.f32 %v1052, %v1054
    %1057 = vrot.lane.b32.xlu0 %v1055, 96
    %v1058 = vpop.permute.xlu0 %1057
    %v1059 = vsel %vm170, %v1058, 0
    %1061 = vmatprep.subr.mxu0 %v906
    %1062 = vmatpush1.msra.mxu0 %v905
    %1063 = vmatprep.subr.mxu0 %v908
    %1064 = vmatpush1.msra.mxu0 %v907
    %1065 = vmatprep.subr.mxu0 %v910
    %1066 = vmatpush1.msra.mxu0 %v909
    %1067 = vmatprep.subr.mxu0 %v912
    %1068 = vmatpush1.msra.mxu0 %v911
    %1069 = vmatprep.subr.mxu0 0.0
    %1070 = vmatpush1.msra.mxu0 0.0
    %1071 = vmatprep.subr.mxu0 0.0
    %1072 = vmatpush1.msra.mxu0 0.0
    %1073 = vmatprep.subr.mxu0 0.0
    %1074 = vmatpush1.msra.mxu0 0.0
    %1075 = vmatprep.subr.mxu0 0.0
    %1076 = vmatpush1.msra.mxu0 0.0
    %1077 = vmatprep.subr.mxu0 0.0
    %1078 = vmatpush1.msra.mxu0 0.0
    %1079 = vmatprep.subr.mxu0 0.0
    %1080 = vmatpush1.msra.mxu0 0.0
    %1081 = vmatprep.subr.mxu0 0.0
    %1082 = vmatpush1.msra.mxu0 0.0
    %1083 = vmatprep.subr.mxu0 0.0
    %1084 = vmatpush1.msra.mxu0 0.0
    %1085 = vmatprep.subr.mxu0 0.0
    %1086 = vmatpush1.msra.mxu0 0.0
    %1087 = vmatprep.subr.mxu0 0.0
    %1088 = vmatpush1.msra.mxu0 0.0
    %1089 = vmatprep.subr.mxu0 0.0
    %1090 = vmatpush1.msra.mxu0 0.0
    %1091 = vmatprep.subr.mxu0 0.0
    %1092 = vmatpush1.msra.mxu0 0.0
    %1093 = vmatprep.subr.mxu0 0.0
    %1094 = vmatpush1.msra.mxu0 0.0
    %1095 = vmatprep.subr.mxu0 0.0
    %1096 = vmatpush1.msra.mxu0 0.0
    %1097 = vmatprep.subr.mxu0 0.0
    %1098 = vmatpush1.msra.mxu0 0.0
    %1099 = vmatprep.subr.mxu0 0.0
    %1100 = vmatpush1.msra.mxu0 0.0
    %1101 = vmatprep.subr.mxu0 0.0
    %1102 = vmatpush1.msra.mxu0 0.0
    %1103 = vmatprep.subr.mxu0 0.0
    %1104 = vmatpush1.msra.mxu0 0.0
    %1105 = vmatprep.subr.mxu0 0.0
    %1106 = vmatpush1.msra.mxu0 0.0
    %1107 = vmatprep.subr.mxu0 0.0
    %1108 = vmatpush1.msra.mxu0 0.0
    %1109 = vmatprep.subr.mxu0 0.0
    %1110 = vmatpush1.msra.mxu0 0.0
    %1111 = vmatprep.subr.mxu0 0.0
    %1112 = vmatpush1.msra.mxu0 0.0
    %1113 = vmatprep.subr.mxu0 0.0
    %1114 = vmatpush1.msra.mxu0 0.0
    %1115 = vmatprep.subr.mxu0 0.0
    %1116 = vmatpush1.msra.mxu0 0.0
    %1117 = vmatprep.subr.mxu0 0.0
    %1118 = vmatpush1.msra.mxu0 0.0
    %1119 = vmatprep.subr.mxu0 0.0
    %1120 = vmatpush1.msra.mxu0 0.0
    %1121 = vmatprep.subr.mxu0 0.0
    %1122 = vmatpush1.msra.mxu0 0.0
    %1123 = vmatprep.subr.mxu0 0.0
    %1124 = vmatpush1.msra.mxu0 0.0
    %1125 = vmatprep.mubr.f32.mxu0 0.0
    %1126 = vmatmul.mubr.f32.gmra.mrb[0].mxu0 %v1059
    %v1127 = vpop.f32.mrb[0].mxu0
    %v1128 = vadd.f32 0.0, %v1127
    %v1129 = vpop.f32.mrb[0].mxu0
    %v1130 = vadd.f32 0.0, %v1129
    %1131 = vdwg.mxu0
    %v1132 = vadd.f32 %v1128, %v919
    %v1133 = vadd.f32 %v1128, %v1005
    %v1134 = vadd.f32 %v1130, %v1005
    %1136 = vrot.lane.b32.xlu0 %v1133, 32
    %v1137 = vpop.permute.xlu0 %1136
    %v1139 = vadd.f32 %v1132, %v1137
    %v1140 = vxor.u32 %v1139, 2147483648
    %v1141 = vmul.f32 %v1140, 1.442695
    %v1142 = vpow.pop %v1141
    %v1143 = vadd.f32 %v1142, 1.0
    %v1144 = vrcp.pop %v1143
    %v1145 = vmul.f32 1.0, %v1144
    %1147 = vrot.lane.b32.xlu0 %v1134, 32
    %v1148 = vpop.permute.xlu0 %1147
    %v1150 = vadd.f32 %v1132, %v1148
    %v1151 = vxor.u32 %v1150, 2147483648
    %v1152 = vmul.f32 %v1151, 1.442695
    %v1153 = vpow.pop %v1152
    %v1154 = vadd.f32 %v1153, 1.0
    %v1155 = vrcp.pop %v1154
    %v1156 = vmul.f32 1.0, %v1155
    %1157 = vrot.lane.b32.xlu0 %v1134, 96
    %v1158 = vpop.permute.xlu0 %1157
    %v1160 = vmul.f32 %v1145, %v1158
    %1162 = vrot.lane.b32.xlu0 %v1160, 64
    %v1163 = vpop.permute.xlu0 %1162
    %v1165 = vadd.f32 %v1132, %v1163
    %v1166 = vtanh.pop %v1165
    %v1167 = vsub.f32 1.0, %v1156
    %1169 = vrot.lane.b32.xlu0 %v1166, 96
    %v1170 = vpop.permute.xlu0 %1169
    %v1172 = vmul.f32 %v1167, %v1170
    %v1173 = vmul.f32 %v1156, %v1055
    %v1174 = vadd.f32 %v1172, %v1173
    %1176 = vrot.lane.b32.xlu0 %v1174, 96
    %v1177 = vpop.permute.xlu0 %1176
    %v1178 = vsel %vm170, %v1177, 0
    %1180 = vmatprep.subr.mxu0 %v906
    %1181 = vmatpush1.msra.mxu0 %v905
    %1182 = vmatprep.subr.mxu0 %v908
    %1183 = vmatpush1.msra.mxu0 %v907
    %1184 = vmatprep.subr.mxu0 %v910
    %1185 = vmatpush1.msra.mxu0 %v909
    %1186 = vmatprep.subr.mxu0 %v912
    %1187 = vmatpush1.msra.mxu0 %v911
    %1188 = vmatprep.subr.mxu0 0.0
    %1189 = vmatpush1.msra.mxu0 0.0
    %1190 = vmatprep.subr.mxu0 0.0
    %1191 = vmatpush1.msra.mxu0 0.0
    %1192 = vmatprep.subr.mxu0 0.0
    %1193 = vmatpush1.msra.mxu0 0.0
    %1194 = vmatprep.subr.mxu0 0.0
    %1195 = vmatpush1.msra.mxu0 0.0
    %1196 = vmatprep.subr.mxu0 0.0
    %1197 = vmatpush1.msra.mxu0 0.0
    %1198 = vmatprep.subr.mxu0 0.0
    %1199 = vmatpush1.msra.mxu0 0.0
    %1200 = vmatprep.subr.mxu0 0.0
    %1201 = vmatpush1.msra.mxu0 0.0
    %1202 = vmatprep.subr.mxu0 0.0
    %1203 = vmatpush1.msra.mxu0 0.0
    %1204 = vmatprep.subr.mxu0 0.0
    %1205 = vmatpush1.msra.mxu0 0.0
    %1206 = vmatprep.subr.mxu0 0.0
    %1207 = vmatpush1.msra.mxu0 0.0
    %1208 = vmatprep.subr.mxu0 0.0
    %1209 = vmatpush1.msra.mxu0 0.0
    %1210 = vmatprep.subr.mxu0 0.0
    %1211 = vmatpush1.msra.mxu0 0.0
    %1212 = vmatprep.subr.mxu0 0.0
    %1213 = vmatpush1.msra.mxu0 0.0
    %1214 = vmatprep.subr.mxu0 0.0
    %1215 = vmatpush1.msra.mxu0 0.0
    %1216 = vmatprep.subr.mxu0 0.0
    %1217 = vmatpush1.msra.mxu0 0.0
    %1218 = vmatprep.subr.mxu0 0.0
    %1219 = vmatpush1.msra.mxu0 0.0
    %1220 = vmatprep.subr.mxu0 0.0
    %1221 = vmatpush1.msra.mxu0 0.0
    %1222 = vmatprep.subr.mxu0 0.0
    %1223 = vmatpush1.msra.mxu0 0.0
    %1224 = vmatprep.subr.mxu0 0.0
    %1225 = vmatpush1.msra.mxu0 0.0
    %1226 = vmatprep.subr.mxu0 0.0
    %1227 = vmatpush1.msra.mxu0 0.0
    %1228 = vmatprep.subr.mxu0 0.0
    %1229 = vmatpush1.msra.mxu0 0.0
    %1230 = vmatprep.subr.mxu0 0.0
    %1231 = vmatpush1.msra.mxu0 0.0
    %1232 = vmatprep.subr.mxu0 0.0
    %1233 = vmatpush1.msra.mxu0 0.0
    %1234 = vmatprep.subr.mxu0 0.0
    %1235 = vmatpush1.msra.mxu0 0.0
    %1236 = vmatprep.subr.mxu0 0.0
    %1237 = vmatpush1.msra.mxu0 0.0
    %1238 = vmatprep.subr.mxu0 0.0
    %1239 = vmatpush1.msra.mxu0 0.0
    %1240 = vmatprep.subr.mxu0 0.0
    %1241 = vmatpush1.msra.mxu0 0.0
    %1242 = vmatprep.subr.mxu0 0.0
    %1243 = vmatpush1.msra.mxu0 0.0
    %1244 = vmatprep.mubr.f32.mxu0 0.0
    %1245 = vmatmul.mubr.f32.gmra.mrb[0].mxu0 %v1178
    %v1246 = vpop.f32.mrb[0].mxu0
    %v1247 = vadd.f32 0.0, %v1246
    %v1248 = vpop.f32.mrb[0].mxu0
    %v1249 = vadd.f32 0.0, %v1248
    %1250 = vdwg.mxu0
    %v1251 = vadd.f32 %v1247, %v919
    %v1252 = vadd.f32 %v1247, %v1005
    %v1253 = vadd.f32 %v1249, %v1005
    %1255 = vrot.lane.b32.xlu0 %v1252, 32
    %v1256 = vpop.permute.xlu0 %1255
    %v1258 = vadd.f32 %v1251, %v1256
    %v1259 = vxor.u32 %v1258, 2147483648
    %v1260 = vmul.f32 %v1259, 1.442695
    %v1261 = vpow.pop %v1260
    %v1262 = vadd.f32 %v1261, 1.0
    %v1263 = vrcp.pop %v1262
    %v1264 = vmul.f32 1.0, %v1263
    %1266 = vrot.lane.b32.xlu0 %v1253, 32
    %v1267 = vpop.permute.xlu0 %1266
    %v1269 = vadd.f32 %v1251, %v1267
    %v1270 = vxor.u32 %v1269, 2147483648
    %v1271 = vmul.f32 %v1270, 1.442695
    %v1272 = vpow.pop %v1271
    %v1273 = vadd.f32 %v1272, 1.0
    %v1274 = vrcp.pop %v1273
    %v1275 = vmul.f32 1.0, %v1274
    %1276 = vrot.lane.b32.xlu0 %v1253, 96
    %v1277 = vpop.permute.xlu0 %1276
    %v1279 = vmul.f32 %v1264, %v1277
    %1281 = vrot.lane.b32.xlu0 %v1279, 64
    %v1282 = vpop.permute.xlu0 %1281
    %v1284 = vadd.f32 %v1251, %v1282
    %v1285 = vtanh.pop %v1284
    %v1286 = vsub.f32 1.0, %v1275
    %1288 = vrot.lane.b32.xlu0 %v1285, 96
    %v1289 = vpop.permute.xlu0 %1288
    %v1291 = vmul.f32 %v1286, %v1289
    %v1292 = vmul.f32 %v1275, %v1174
    %v1293 = vadd.f32 %v1291, %v1292
    %1295 = vrot.lane.b32.xlu0 %v1293, 96
    %v1296 = vpop.permute.xlu0 %1295
    %v1297 = vsel %vm170, %v1296, 0
    %1299 = vmatprep.subr.mxu0 %v906
    %1300 = vmatpush1.msra.mxu0 %v905
    %1301 = vmatprep.subr.mxu0 %v908
    %1302 = vmatpush1.msra.mxu0 %v907
    %1303 = vmatprep.subr.mxu0 %v910
    %1304 = vmatpush1.msra.mxu0 %v909
    %1305 = vmatprep.subr.mxu0 %v912
    %1306 = vmatpush1.msra.mxu0 %v911
    %1307 = vmatprep.subr.mxu0 0.0
    %1308 = vmatpush1.msra.mxu0 0.0
    %1309 = vmatprep.subr.mxu0 0.0
    %1310 = vmatpush1.msra.mxu0 0.0
    %1311 = vmatprep.subr.mxu0 0.0
    %1312 = vmatpush1.msra.mxu0 0.0
    %1313 = vmatprep.subr.mxu0 0.0
    %1314 = vmatpush1.msra.mxu0 0.0
    %1315 = vmatprep.subr.mxu0 0.0
    %1316 = vmatpush1.msra.mxu0 0.0
    %1317 = vmatprep.subr.mxu0 0.0
    %1318 = vmatpush1.msra.mxu0 0.0
    %1319 = vmatprep.subr.mxu0 0.0
    %1320 = vmatpush1.msra.mxu0 0.0
    %1321 = vmatprep.subr.mxu0 0.0
    %1322 = vmatpush1.msra.mxu0 0.0
    %1323 = vmatprep.subr.mxu0 0.0
    %1324 = vmatpush1.msra.mxu0 0.0
    %1325 = vmatprep.subr.mxu0 0.0
    %1326 = vmatpush1.msra.mxu0 0.0
    %1327 = vmatprep.subr.mxu0 0.0
    %1328 = vmatpush1.msra.mxu0 0.0
    %1329 = vmatprep.subr.mxu0 0.0
    %1330 = vmatpush1.msra.mxu0 0.0
    %1331 = vmatprep.subr.mxu0 0.0
    %1332 = vmatpush1.msra.mxu0 0.0
    %1333 = vmatprep.subr.mxu0 0.0
    %1334 = vmatpush1.msra.mxu0 0.0
    %1335 = vmatprep.subr.mxu0 0.0
    %1336 = vmatpush1.msra.mxu0 0.0
    %1337 = vmatprep.subr.mxu0 0.0
    %1338 = vmatpush1.msra.mxu0 0.0
    %1339 = vmatprep.subr.mxu0 0.0
    %1340 = vmatpush1.msra.mxu0 0.0
    %1341 = vmatprep.subr.mxu0 0.0
    %1342 = vmatpush1.msra.mxu0 0.0
    %1343 = vmatprep.subr.mxu0 0.0
    %1344 = vmatpush1.msra.mxu0 0.0
    %1345 = vmatprep.subr.mxu0 0.0
    %1346 = vmatpush1.msra.mxu0 0.0
    %1347 = vmatprep.subr.mxu0 0.0
    %1348 = vmatpush1.msra.mxu0 0.0
    %1349 = vmatprep.subr.mxu0 0.0
    %1350 = vmatpush1.msra.mxu0 0.0
    %1351 = vmatprep.subr.mxu0 0.0
    %1352 = vmatpush1.msra.mxu0 0.0
    %1353 = vmatprep.subr.mxu0 0.0
    %1354 = vmatpush1.msra.mxu0 0.0
    %1355 = vmatprep.subr.mxu0 0.0
    %1356 = vmatpush1.msra.mxu0 0.0
    %1357 = vmatprep.subr.mxu0 0.0
    %1358 = vmatpush1.msra.mxu0 0.0
    %1359 = vmatprep.subr.mxu0 0.0
    %1360 = vmatpush1.msra.mxu0 0.0
    %1361 = vmatprep.subr.mxu0 0.0
    %1362 = vmatpush1.msra.mxu0 0.0
    %1363 = vmatprep.mubr.f32.mxu0 0.0
    %1364 = vmatmul.mubr.f32.gmra.mrb[0].mxu0 %v1297
    %v1365 = vpop.f32.mrb[0].mxu0
    %v1366 = vadd.f32 0.0, %v1365
    %v1367 = vpop.f32.mrb[0].mxu0
    %v1368 = vadd.f32 0.0, %v1367
    %1369 = vdwg.mxu0
    %v1370 = vadd.f32 %v1366, %v919
    %v1371 = vadd.f32 %v1366, %v1005
    %v1372 = vadd.f32 %v1368, %v1005
    %1374 = vrot.lane.b32.xlu0 %v1371, 32
    %v1375 = vpop.permute.xlu0 %1374
    %v1377 = vadd.f32 %v1370, %v1375
    %v1378 = vxor.u32 %v1377, 2147483648
    %v1379 = vmul.f32 %v1378, 1.442695
    %v1380 = vpow.pop %v1379
    %v1381 = vadd.f32 %v1380, 1.0
    %v1382 = vrcp.pop %v1381
    %v1383 = vmul.f32 1.0, %v1382
    %1385 = vrot.lane.b32.xlu0 %v1372, 32
    %v1386 = vpop.permute.xlu0 %1385
    %v1388 = vadd.f32 %v1370, %v1386
    %v1389 = vxor.u32 %v1388, 2147483648
    %v1390 = vmul.f32 %v1389, 1.442695
    %v1391 = vpow.pop %v1390
    %v1392 = vadd.f32 %v1391, 1.0
    %v1393 = vrcp.pop %v1392
    %v1394 = vmul.f32 1.0, %v1393
    %1395 = vrot.lane.b32.xlu0 %v1372, 96
    %v1396 = vpop.permute.xlu0 %1395
    %v1398 = vmul.f32 %v1383, %v1396
    %1400 = vrot.lane.b32.xlu0 %v1398, 64
    %v1401 = vpop.permute.xlu0 %1400
    %v1403 = vadd.f32 %v1370, %v1401
    %v1404 = vtanh.pop %v1403
    %v1405 = vsub.f32 1.0, %v1394
    %1407 = vrot.lane.b32.xlu0 %v1404, 96
    %v1408 = vpop.permute.xlu0 %1407
    %v1410 = vmul.f32 %v1405, %v1408
    %v1411 = vmul.f32 %v1394, %v1293
    %v1412 = vadd.f32 %v1410, %v1411
    %1414 = vrot.lane.b32.xlu0 %v1293, 32
    %v1415 = vpop.permute.xlu0 %1414
    %1418 = vrot.lane.b32.xlu0 %v1412, 64
    %v1419 = vpop.permute.xlu0 %1418
    %v1421 = vsel %vm170, %v1058, %v1174
    %vm1422 = vcmask 523264
    %v1423 = vsel %vm1422, %v1421, %v1415
    %vm1424 = vcmask 785408
    %v1425 = vsel %vm1424, %v1423, %v1419
    %v1426 = vld [vmem:[%s9] sm:$0xff]
    %v1427 = vld [vmem:[%s9 + $0x8] sm:$0xff]
    %v1428 = vld [vmem:[%s9 + $0x10] sm:$0xff]
    %v1429 = vld [vmem:[%s9 + $0x18] sm:$0xff]
    %v1430 = vld [vmem:[%s9 + $0x20] sm:$0xff]
    %v1431 = vld [vmem:[%s9 + $0x28] sm:$0xff]
    %v1432 = vld [vmem:[%s9 + $0x30] sm:$0xff]
    %v1433 = vld [vmem:[%s9 + $0x38] sm:$0xff]
    %v1434 = vld [vmem:[%s9 + $0x40] sm:$0xff]
    %v1435 = vld [vmem:[%s9 + $0x48] sm:$0xff]
    %v1436 = vld [vmem:[%s9 + $0x50] sm:$0xff]
    %v1437 = vld [vmem:[%s9 + $0x58] sm:$0xff]
    %v1438 = vld [vmem:[%s9 + $0x60] sm:$0xff]
    %v1439 = vld [vmem:[%s9 + $0x68] sm:$0xff]
    %v1440 = vld [vmem:[%s9 + $0x70] sm:$0xff]
    %v1441 = vld [vmem:[%s9 + $0x78] sm:$0xff]
    %v1442 = vld [vmem:[%s10] sm:$0x1]
    %v1444 = vlaneseq
    %v1445 = vshrl.u32 %v1444, 7
    %v1446 = vsub.s32 0, %v1445
    %v1447 = vrot.slane %v1442, %v1446
    %1449 = vmatprep.subr.mxu0 0.0
    %1450 = vmatpush1.msra.mxu0 %v1426
    %1451 = vmatprep.subr.mxu0 0.0
    %1452 = vmatpush1.msra.mxu0 %v1427
    %1453 = vmatprep.subr.mxu0 0.0
    %1454 = vmatpush1.msra.mxu0 %v1428
    %1455 = vmatprep.subr.mxu0 0.0
    %1456 = vmatpush1.msra.mxu0 %v1429
    %1457 = vmatprep.subr.mxu0 0.0
    %1458 = vmatpush1.msra.mxu0 %v1430
    %1459 = vmatprep.subr.mxu0 0.0
    %1460 = vmatpush1.msra.mxu0 %v1431
    %1461 = vmatprep.subr.mxu0 0.0
    %1462 = vmatpush1.msra.mxu0 %v1432
    %1463 = vmatprep.subr.mxu0 0.0
    %1464 = vmatpush1.msra.mxu0 %v1433
    %1465 = vmatprep.subr.mxu0 0.0
    %1466 = vmatpush1.msra.mxu0 %v1434
    %1467 = vmatprep.subr.mxu0 0.0
    %1468 = vmatpush1.msra.mxu0 %v1435
    %1469 = vmatprep.subr.mxu0 0.0
    %1470 = vmatpush1.msra.mxu0 %v1436
    %1471 = vmatprep.subr.mxu0 0.0
    %1472 = vmatpush1.msra.mxu0 %v1437
    %1473 = vmatprep.subr.mxu0 0.0
    %1474 = vmatpush1.msra.mxu0 %v1438
    %1475 = vmatprep.subr.mxu0 0.0
    %1476 = vmatpush1.msra.mxu0 %v1439
    %1477 = vmatprep.subr.mxu0 0.0
    %1478 = vmatpush1.msra.mxu0 %v1440
    %1479 = vmatprep.subr.mxu0 0.0
    %1480 = vmatpush1.msra.mxu0 %v1441
    %1481 = vmatprep.subr.mxu0 0.0
    %1482 = vmatpush1.msra.mxu0 0.0
    %1483 = vmatprep.subr.mxu0 0.0
    %1484 = vmatpush1.msra.mxu0 0.0
    %1485 = vmatprep.subr.mxu0 0.0
    %1486 = vmatpush1.msra.mxu0 0.0
    %1487 = vmatprep.subr.mxu0 0.0
    %1488 = vmatpush1.msra.mxu0 0.0
    %1489 = vmatprep.subr.mxu0 0.0
    %1490 = vmatpush1.msra.mxu0 0.0
    %1491 = vmatprep.subr.mxu0 0.0
    %1492 = vmatpush1.msra.mxu0 0.0
    %1493 = vmatprep.subr.mxu0 0.0
    %1494 = vmatpush1.msra.mxu0 0.0
    %1495 = vmatprep.subr.mxu0 0.0
    %1496 = vmatpush1.msra.mxu0 0.0
    %1497 = vmatprep.subr.mxu0 0.0
    %1498 = vmatpush1.msra.mxu0 0.0
    %1499 = vmatprep.subr.mxu0 0.0
    %1500 = vmatpush1.msra.mxu0 0.0
    %1501 = vmatprep.subr.mxu0 0.0
    %1502 = vmatpush1.msra.mxu0 0.0
    %1503 = vmatprep.subr.mxu0 0.0
    %1504 = vmatpush1.msra.mxu0 0.0
    %1505 = vmatprep.subr.mxu0 0.0
    %1506 = vmatpush1.msra.mxu0 0.0
    %1507 = vmatprep.subr.mxu0 0.0
    %1508 = vmatpush1.msra.mxu0 0.0
    %1509 = vmatprep.subr.mxu0 0.0
    %1510 = vmatpush1.msra.mxu0 0.0
    %1511 = vmatprep.subr.mxu0 0.0
    %1512 = vmatpush1.msra.mxu0 0.0
    %1513 = vmatprep.mubr.f32.mxu0 0.0
    %1514 = vmatmul.mubr.f32.gmra.mrb[0].mxu0 %v1425
    %v1515 = vpop.f32.mrb[0].mxu0
    %v1516 = vadd.f32 %v1447, %v1515
    %v1517 = vpop.f32.mrb[0].mxu0
    %1518 = vdwg.mxu0
    %vm1519 = vcmask 254976
    %1520 = vst.msk [vmem:[#allocation2] sm:$0x3] %vm1519, %v1516
    // Predicated region
    $region46: #{tpu_custom_call.1} parent=1 // pred_check
      _
    $region47: #{tpu_custom_call.1} parent=1 // pred_check_branch
      %1522 = sbr.rel (0) target = $region49
    $region48: #{tpu_custom_call.1} parent=1 // pred_region
      %s1524 = ssub.s32 32, 32
      %1525 = vsyncadd [#allocation3], %s1524
      %s1527 = sshll.u32 [#allocation2], 4
      %s1528 = int_to_ptr.vmem [resolvable:$true] %s1527
      %1530 = dma.vmem_to_hbm [thread:$0]  %s1528, 32, %s11, [#allocation3]
    $region49: #{tpu_custom_call.1} parent=1 // pred_fallthru
      _
    // Predicated region
    $region50: #{tpu_custom_call.1} parent=1 // pred_check
      _
    $region51: #{tpu_custom_call.1} parent=1 // pred_check_branch
      %1532 = sbr.rel (0) target = $region53
    $region52: #{tpu_custom_call.1} parent=1 // pred_region
      %1533 = dma.done [#allocation3], 32
    $region53: #{tpu_custom_call.1} parent=1 // pred_fallthru
      _
    %1534 = vsyncpa [#allocation3], 1

</llo_original>
